<compile_context>
chip_gen: v7x
topology: tpu7x:2x2x1
jax: 0.10.0
libtpu: 0.0.40
codegen_flags: <defaults>
</compile_context>

<pallas_src>
import functools

import jax
import jax.numpy as jnp
from jax import lax
from jax.experimental import pallas as pl
from jax.experimental.pallas import tpu as pltpu

EPS = 1e-5


def _bottleneck_kernel(B, H, W, C_in, C_mid, C_out, pad_len, lo,
                       x_ref, w1_ref, b1_ref, w2_ref, b2_ref, w3_ref, b3_ref,
                       out_ref, pad_ref):
    """One batch tile: conv1x1+bn+relu -> conv3x3+bn+relu -> conv1x1+bn,
    residual add (f32), relu. BN scales are pre-folded into the weights."""
    HW = H * W
    M = B * HW
    cdt = w1_ref.dtype                      # matmul operand dtype (f32 / bf16)

    # ---- conv1 (1x1) + bn1 + relu1 -------------------------------------
    x2d = x_ref[...].reshape(M, C_in)                          # f32 residual
    h1 = jnp.dot(x2d.astype(cdt), w1_ref[...],
                 preferred_element_type=jnp.float32)
    h1 = jnp.maximum(h1 + b1_ref[...], 0.0)                    # (M, C_mid) f32

    # ---- build dx = -1 / 0 / +1 shifted copies of h1 once ---------------
    # pltpu.roll is an XLU sublane rotation; the rows that wrap across image /
    # spatial-row boundaries are exactly the masked rows, so rolling the flat
    # (M, C_mid) view is safe. Masks are applied in f32 before the cast.
    col = lax.broadcasted_iota(jnp.int32, (M, 1), 0) % W
    left = jnp.where(col != 0, pltpu.roll(h1, shift=1, axis=0), 0.0)
    right = jnp.where(col != W - 1, pltpu.roll(h1, shift=M - 1, axis=0), 0.0)
    trip = jnp.concatenate([left, h1, right], axis=-1)         # (M, 3*C_mid)

    # ---- stage [left | center | right] into the row-padded scratch ------
    # pad_ref[b, lo + p, :] holds the triple for flat spatial position p; the
    # two small zero borders are rewritten each step (cheap, and correct on
    # megacore regardless of how grid steps are sharded).
    pad_ref[:, :lo, :] = jnp.zeros((B, lo, 3 * C_mid), pad_ref.dtype)
    pad_ref[:, lo + HW:, :] = jnp.zeros((B, pad_len - lo - HW, 3 * C_mid),
                                        pad_ref.dtype)
    pad_ref[:, lo:lo + HW, :] = trip.reshape(B, HW, 3 * C_mid).astype(
        pad_ref.dtype)

    # ---- conv2 (3x3, stride=1, pad=1) + bn2 + relu2 ----------------------
    # Three matmuls with K = 3*C_mid (one per dy); slice starts differ only by
    # multiples of W (sublane-aligned when W % 8 == 0). Value-chained
    # accumulation, single write of the result.
    acc = None
    for dy in range(3):
        start = lo + (dy - 1) * W
        win = pad_ref[:, start:start + HW, :].reshape(M, 3 * C_mid)
        part = jnp.dot(win, w2_ref[dy], preferred_element_type=jnp.float32)
        acc = part if acc is None else acc + part
    h2 = jnp.maximum(acc + b2_ref[...], 0.0)        # bn2 shift in the epilogue

    # ---- conv3 (1x1) + bn3 + residual add + relu3 ------------------------
    h3 = jnp.dot(h2.astype(cdt), w3_ref[...],
                 preferred_element_type=jnp.float32) + b3_ref[...]
    out = jnp.maximum(h3 + x2d, 0.0)                # C_in == C_out, f32 skip
    out_ref[...] = out.reshape(B, H, W, C_out).astype(out_ref.dtype)


def _fold_bn(gamma, beta, mean, var):
    scale = gamma / jnp.sqrt(var + EPS)
    shift = beta - mean * scale
    return scale, shift


def _default_vmem_limit_bytes():
    try:
        cap = int(getattr(pltpu.get_tpu_info(), "vmem_capacity_bytes",
                          128 * 1024 * 1024))
    except Exception:
        cap = 128 * 1024 * 1024
    # ~24 MiB headroom: ~40 MiB on v7x (64 MiB phys), ~104 MiB on v5e/v6e.
    return max(32 * 1024 * 1024, cap - 24 * 1024 * 1024)


def _choose_batch_tile(N, HW, per_image_bytes, vmem_budget, target_m=1024):
    cap = max(1, int(vmem_budget // max(1, per_image_bytes)))
    want = min(N, cap, max(1, -(-target_m // HW)))
    divs = [d for d in range(1, N + 1) if N % d == 0 and d <= want]
    bt = max(divs)
    # Prefer an even number of grid steps (2 TensorCores on v7x / megacore) as
    # long as the matmul M dimension does not drop below half of the best.
    even = [d for d in divs
            if (N // d) % 2 == 0 and 2 * d * HW >= min(bt * HW, target_m)]
    if even:
        bt = max(even)
    return bt


def bottleneck_forward_nhwc(x_nhwc, params, *, compute_dtype=jnp.float32,
                            batch_tile=None, vmem_limit_bytes=None):
    """Pallas Bottleneck.forward (stride=1, downsample=None, eval-mode BN).

    NHWC in / NHWC out — use this entry point when chaining blocks.
    """
    N, H, W, C_in = x_nhwc.shape
    w1_oihw, w2_oihw, w3_oihw = params["w1"], params["w2"], params["w3"]
    C_mid = w1_oihw.shape[0]
    C_out = w3_oihw.shape[0]
    assert C_out == C_in, "residual add requires inplanes == planes * expansion"
    # NOTE: production ResNet stages should use C_mid / C_out that are
    # multiples of 128 so matmul K/N and output lanes are fully packed.

    if vmem_limit_bytes is None:
        vmem_limit_bytes = _default_vmem_limit_bytes()

    # Fold BN scales into conv weights; keep only per-channel shifts.
    s1, b1 = _fold_bn(params["g1"], params["be1"], params["m1"], params["v1"])
    s2, b2 = _fold_bn(params["g2"], params["be2"], params["m2"], params["v2"])
    s3, b3 = _fold_bn(params["g3"], params["be3"], params["m3"], params["v3"])

    w1 = (jnp.transpose(w1_oihw[:, :, 0, 0], (1, 0))
          * s1[None, :]).astype(compute_dtype)
    w2 = jnp.transpose(w2_oihw, (2, 3, 1, 0)) * s2[None, None, None, :]
    # Per-dy weight slabs of shape (3*C_mid, C_mid): K index = dx*C_mid + i.
    w2 = w2.reshape(3, 3 * C_mid, C_mid).astype(compute_dtype)
    w3 = (jnp.transpose(w3_oihw[:, :, 0, 0], (1, 0))
          * s3[None, :]).astype(compute_dtype)
    b1 = b1.reshape(1, C_mid).astype(jnp.float32)
    b2 = b2.reshape(1, C_mid).astype(jnp.float32)
    b3 = b3.reshape(1, C_out).astype(jnp.float32)

    # Residual path stays f32: x is fed to the kernel in f32 and only the
    # conv1 matmul operand is cast to compute_dtype inside the kernel.
    x_f32 = x_nhwc.astype(jnp.float32)
    out_dtype = x_nhwc.dtype

    HW = H * W
    act_bytes = jnp.dtype(compute_dtype).itemsize
    out_bytes = jnp.dtype(out_dtype).itemsize

    # Row-padded, flat-spatial scratch geometry for the 3x3 conv (dy offsets
    # of +-W only, so lo >= W suffices).
    lo = ((W + 7) // 8) * 8                        # sublane-aligned data start
    pad_len = ((lo + HW + W + 7) // 8) * 8         # room for the dy=+1 window

    if batch_tile is None:
        weight_bytes = ((C_in * C_mid + 9 * C_mid * C_mid + C_mid * C_out)
                        * act_bytes + (2 * C_mid + C_out) * 4)
        per_image = (2 * HW * C_in * 4                 # f32 input block (dbl-buf)
                     + 2 * HW * C_out * out_bytes      # output block (dbl-buf)
                     + pad_len * 3 * C_mid * act_bytes  # padded triple scratch
                     + 6 * HW * C_mid * 4              # live f32 temps
                     + HW * 3 * C_mid * (act_bytes + 4))  # staged triple + window
        budget = max(per_image,
                     vmem_limit_bytes - 2 * weight_bytes - (4 << 20))
        batch_tile = _choose_batch_tile(N, HW, per_image, budget)
    assert N % batch_tile == 0

    kernel = functools.partial(_bottleneck_kernel, batch_tile, H, W,
                               C_in, C_mid, C_out, pad_len, lo)
    return pl.pallas_call(
        kernel,
        out_shape=jax.ShapeDtypeStruct((N, H, W, C_out), out_dtype),
        grid_spec=pltpu.PrefetchScalarGridSpec(
            num_scalar_prefetch=0,
            grid=(N // batch_tile,),
            in_specs=[
                pl.BlockSpec((batch_tile, H, W, C_in), lambda n: (n, 0, 0, 0)),
                pl.BlockSpec((C_in, C_mid), lambda n: (0, 0)),
                pl.BlockSpec((1, C_mid), lambda n: (0, 0)),
                pl.BlockSpec((3, 3 * C_mid, C_mid), lambda n: (0, 0, 0)),
                pl.BlockSpec((1, C_mid), lambda n: (0, 0)),
                pl.BlockSpec((C_mid, C_out), lambda n: (0, 0)),
                pl.BlockSpec((1, C_out), lambda n: (0, 0)),
            ],
            out_specs=pl.BlockSpec((batch_tile, H, W, C_out),
                                   lambda n: (n, 0, 0, 0)),
            scratch_shapes=[
                pltpu.VMEM((batch_tile, pad_len, 3 * C_mid), compute_dtype),
            ],
        ),
        compiler_params=pltpu.CompilerParams(
            dimension_semantics=("parallel",),
            vmem_limit_bytes=vmem_limit_bytes),
    )(x_f32, w1, b1, w2, b2, w3, b3)


def bottleneck_forward(x_nchw, params, **kwargs):
    """NCHW wrapper matching the PyTorch module's layout."""
    # TODO(synk): keep activations NHWC end-to-end when chaining blocks so
    # these two full-HBM-round-trip transposes disappear.
    out_nhwc = bottleneck_forward_nhwc(
        jnp.transpose(x_nchw, (0, 2, 3, 1)), params, **kwargs)
    return jnp.transpose(out_nhwc, (0, 3, 1, 2))


def bottleneck_reference(x, p):
    """Pure-JAX NCHW reference mirroring the PyTorch forward (eval-mode BN)."""
    dn = ("NCHW", "OIHW", "NCHW")

    def bn(y, g, be, m, v):
        return ((y - m[None, :, None, None])
                * (g / jnp.sqrt(v + EPS))[None, :, None, None]
                + be[None, :, None, None])

    out = lax.conv_general_dilated(x, p["w1"], (1, 1), "VALID",
                                   dimension_numbers=dn)
    out = jax.nn.relu(bn(out, p["g1"], p["be1"], p["m1"], p["v1"]))
    out = lax.conv_general_dilated(out, p["w2"], (1, 1), ((1, 1), (1, 1)),
                                   dimension_numbers=dn)
    out = jax.nn.relu(bn(out, p["g2"], p["be2"], p["m2"], p["v2"]))
    out = lax.conv_general_dilated(out, p["w3"], (1, 1), "VALID",
                                   dimension_numbers=dn)
    out = bn(out, p["g3"], p["be3"], p["m3"], p["v3"])
    return jax.nn.relu(out + x)


def make_params(key, inplanes, planes):
    expansion = 4
    outplanes = planes * expansion
    ks = jax.random.split(key, 12)

    def bn_params(kg, kb, km, kv, c):
        return (jax.random.uniform(kg, (c,), jnp.float32, 0.5, 1.5),
                0.1 * jax.random.normal(kb, (c,), jnp.float32),
                0.1 * jax.random.normal(km, (c,), jnp.float32),
                jax.random.uniform(kv, (c,), jnp.float32, 0.5, 1.5))

    g1, be1, m1, v1 = bn_params(ks[3], ks[4], ks[5], ks[6], planes)
    g2, be2, m2, v2 = bn_params(ks[7], ks[8], ks[9], ks[10], planes)
    k11 = jax.random.split(ks[11], 4)
    g3, be3, m3, v3 = bn_params(k11[0], k11[1], k11[2], k11[3], outplanes)

    return dict(
        w1=0.1 * jax.random.normal(ks[0], (planes, inplanes, 1, 1), jnp.float32),
        w2=0.1 * jax.random.normal(ks[1], (planes, planes, 3, 3), jnp.float32),
        w3=0.1 * jax.random.normal(ks[2], (outplanes, planes, 1, 1), jnp.float32),
        g1=g1, be1=be1, m1=m1, v1=v1,
        g2=g2, be2=be2, m2=m2, v2=v2,
        g3=g3, be3=be3, m3=m3, v3=v3,
    )


if __name__ == "__main__":
    # Small shapes with inplanes = planes * expansion so downsample=None and
    # the residual add is well defined (W and H*W multiples of 8 = clean path).
    N, planes, H, W = 2, 8, 8, 8
    inplanes = planes * 4                       # 32

    key = jax.random.PRNGKey(0)
    kx, kp = jax.random.split(key)
    x = jax.random.normal(kx, (N, inplanes, H, W), jnp.float32)   # NCHW
    params = make_params(kp, inplanes, planes)

    ref = jax.block_until_ready(bottleneck_reference(x, params))

    # f32 compute path: strict check.
    out = jax.block_until_ready(bottleneck_forward(x, params))
    assert out.shape == (N, inplanes, H, W)
    assert jnp.allclose(out, ref, rtol=1e-4, atol=1e-4), (
        float(jnp.max(jnp.abs(out - ref))))

    # bf16 matmul-operand path (v6e/v7x fast path, f32 residual): loose check.
    out_bf16 = jax.block_until_ready(
        bottleneck_forward(x, params, compute_dtype=jnp.bfloat16))
    assert jnp.allclose(out_bf16, ref, rtol=1e-1, atol=1e-1), (
        float(jnp.max(jnp.abs(out_bf16 - ref))))

    print("KERNEL_OK")
</pallas_src>

<mosaic_0001>
module attributes {stable_mosaic.version = 11 : i64} {
  func.func @_bottleneck_kernel(%arg0: i32, %arg1: memref<1x8x8x32xf32, #tpu.memory_space<vmem>>, %arg2: memref<32x8xf32, #tpu.memory_space<vmem>>, %arg3: memref<1x8xf32, #tpu.memory_space<vmem>>, %arg4: memref<3x24x8xf32, #tpu.memory_space<vmem>>, %arg5: memref<1x8xf32, #tpu.memory_space<vmem>>, %arg6: memref<8x32xf32, #tpu.memory_space<vmem>>, %arg7: memref<1x32xf32, #tpu.memory_space<vmem>>, %arg8: memref<1x8x8x32xf32, #tpu.memory_space<vmem>>, %arg9: memref<1x80x24xf32, #tpu.memory_space<vmem>>) attributes {dimension_semantics = [#tpu.dimension_semantics<parallel>], iteration_bounds = array<i64: 2>, scalar_prefetch = 0 : i64, scratch_operands = 1 : i64, tpu.core_type = #tpu.core_type<tc>, window_params = [{transform_indices = @transform_0, window_bounds = array<i64: 1, 8, 8, 32>}, {pipeline_mode = #tpu.pipeline_mode<synchronous>, transform_indices = @transform_1, window_bounds = array<i64: 32, 8>}, {pipeline_mode = #tpu.pipeline_mode<synchronous>, transform_indices = @transform_2, window_bounds = array<i64: 1, 8>}, {pipeline_mode = #tpu.pipeline_mode<synchronous>, transform_indices = @transform_3, window_bounds = array<i64: 3, 24, 8>}, {pipeline_mode = #tpu.pipeline_mode<synchronous>, transform_indices = @transform_4, window_bounds = array<i64: 1, 8>}, {pipeline_mode = #tpu.pipeline_mode<synchronous>, transform_indices = @transform_5, window_bounds = array<i64: 8, 32>}, {pipeline_mode = #tpu.pipeline_mode<synchronous>, transform_indices = @transform_6, window_bounds = array<i64: 1, 32>}, {transform_indices = @transform_7, window_bounds = array<i64: 1, 8, 8, 32>}]} {
    %c0 = arith.constant 0 : index
    %c0_0 = arith.constant 0 : index
    %c0_1 = arith.constant 0 : index
    %c0_2 = arith.constant 0 : index
    %0 = vector.load %arg1[%c0, %c0_0, %c0_1, %c0_2] : memref<1x8x8x32xf32, #tpu.memory_space<vmem>>, vector<1x8x8x32xf32>
    %1 = vector.shape_cast %0 : vector<1x8x8x32xf32> to vector<64x32xf32>
    %c0_3 = arith.constant 0 : index
    %c0_4 = arith.constant 0 : index
    %2 = vector.load %arg2[%c0_3, %c0_4] : memref<32x8xf32, #tpu.memory_space<vmem>>, vector<32x8xf32>
    %cst = arith.constant dense<0.000000e+00> : vector<64x8xf32>
    %3 = tpu.matmul %1, %2, %cst {dimension_numbers = #tpu.dot_dimension_numbers<[1], [0], [0], [1], [0, 0, 1, 1], [], []>} : vector<64x32xf32>, vector<32x8xf32>, vector<64x8xf32> -> vector<64x8xf32>
    %c0_5 = arith.constant 0 : index
    %c0_6 = arith.constant 0 : index
    %4 = vector.load %arg3[%c0_5, %c0_6] : memref<1x8xf32, #tpu.memory_space<vmem>>, vector<1x8xf32>
    %5 = vector.broadcast %4 : vector<1x8xf32> to vector<64x8xf32>
    %6 = arith.addf %3, %5 : vector<64x8xf32>
    %cst_7 = arith.constant 0.000000e+00 : f32
    %7 = vector.broadcast %cst_7 : f32 to vector<64x8xf32>
    %8 = arith.maximumf %6, %7 : vector<64x8xf32>
    %9 = tpu.iota {dimensions = array<i32: 0>} : vector<64x1xi32>
    %c8_i32 = arith.constant 8 : i32
    %c0_i32 = arith.constant 0 : i32
    %10 = arith.cmpi eq, %c8_i32, %c0_i32 : i32
    %c1_i32 = arith.constant 1 : i32
    %11 = arith.select %10, %c1_i32, %c8_i32 : i32
    %12 = vector.broadcast %11 : i32 to vector<64x1xi32>
    %13 = arith.remsi %9, %12 : vector<64x1xi32>
    %c0_i32_8 = arith.constant 0 : i32
    %14 = vector.broadcast %c0_i32_8 : i32 to vector<64x1xi32>
    %15 = arith.cmpi ne, %13, %14 : vector<64x1xi32>
    %c0_i32_9 = arith.constant 0 : i32
    %16 = vector.broadcast %c0_i32_9 : i32 to vector<64x1xi32>
    %17 = arith.cmpi slt, %13, %16 : vector<64x1xi32>
    %c0_i32_10 = arith.constant 0 : i32
    %18 = arith.cmpi slt, %11, %c0_i32_10 : i32
    %19 = vector.broadcast %18 : i1 to vector<64x1xi1>
    %20 = vector.broadcast %19 : vector<64x1xi1> to vector<64x1xi1>
    %21 = arith.xori %17, %20 : vector<64x1xi1>
    %22 = arith.andi %21, %15 : vector<64x1xi1>
    %23 = vector.broadcast %11 : i32 to vector<64x1xi32>
    %24 = arith.addi %13, %23 : vector<64x1xi32>
    %25 = arith.select %22, %24, %13 : vector<64x1xi1>, vector<64x1xi32>
    %c0_i32_11 = arith.constant 0 : i32
    %26 = vector.broadcast %c0_i32_11 : i32 to vector<64x1xi32>
    %27 = arith.cmpi ne, %25, %26 : vector<64x1xi32>
    %c1_i32_12 = arith.constant 1 : i32
    %28 = tpu.dynamic_rotate %8 by %c1_i32_12 dim 0 : vector<64x8xf32>, i32 -> vector<64x8xf32>
    %cst_13 = arith.constant 0.000000e+00 : f32
    %29 = vector.shape_cast %27 : vector<64x1xi1> to vector<64x1xi1>
    %30 = vector.broadcast %29 : vector<64x1xi1> to vector<64x8xi1>
    %31 = vector.broadcast %cst_13 : f32 to vector<64x8xf32>
    %32 = arith.select %30, %28, %31 : vector<64x8xi1>, vector<64x8xf32>
    %c7_i32 = arith.constant 7 : i32
    %33 = vector.broadcast %c7_i32 : i32 to vector<64x1xi32>
    %34 = arith.cmpi ne, %25, %33 : vector<64x1xi32>
    %c63_i32 = arith.constant 63 : i32
    %35 = tpu.dynamic_rotate %8 by %c63_i32 dim 0 : vector<64x8xf32>, i32 -> vector<64x8xf32>
    %cst_14 = arith.constant 0.000000e+00 : f32
    %36 = vector.shape_cast %34 : vector<64x1xi1> to vector<64x1xi1>
    %37 = vector.broadcast %36 : vector<64x1xi1> to vector<64x8xi1>
    %38 = vector.broadcast %cst_14 : f32 to vector<64x8xf32>
    %39 = arith.select %37, %35, %38 : vector<64x8xi1>, vector<64x8xf32>
    %40 = tpu.concatenate %32, %8, %39 in 1 : vector<64x8xf32>, vector<64x8xf32>, vector<64x8xf32> -> vector<64x24xf32>
    %cst_15 = arith.constant 0.000000e+00 : f32
    %41 = vector.broadcast %cst_15 : f32 to vector<1x8x24xf32>
    %c0_16 = arith.constant 0 : index
    %c0_17 = arith.constant 0 : index
    %c0_18 = arith.constant 0 : index
    %42 = vector.load %arg9[%c0_16, %c0_17, %c0_18] : memref<1x80x24xf32, #tpu.memory_space<vmem>>, vector<1x8x24xf32>
    tpu.vector_store %arg9[%c0_16, %c0_17, %c0_18], %41 {strides = array<i32>} : memref<1x80x24xf32, #tpu.memory_space<vmem>>, vector<1x8x24xf32>,
    %cst_19 = arith.constant 0.000000e+00 : f32
    %43 = vector.broadcast %cst_19 : f32 to vector<1x8x24xf32>
    %c0_20 = arith.constant 0 : index
    %c72 = arith.constant 72 : index
    %c0_21 = arith.constant 0 : index
    %44 = vector.load %arg9[%c0_20, %c72, %c0_21] : memref<1x80x24xf32, #tpu.memory_space<vmem>>, vector<1x8x24xf32>
    tpu.vector_store %arg9[%c0_20, %c72, %c0_21], %43 {strides = array<i32>} : memref<1x80x24xf32, #tpu.memory_space<vmem>>, vector<1x8x24xf32>,
    %45 = vector.shape_cast %40 : vector<64x24xf32> to vector<1x64x24xf32>
    %c0_22 = arith.constant 0 : index
    %c8 = arith.constant 8 : index
    %c0_23 = arith.constant 0 : index
    %46 = vector.load %arg9[%c0_22, %c8, %c0_23] : memref<1x80x24xf32, #tpu.memory_space<vmem>>, vector<1x64x24xf32>
    tpu.vector_store %arg9[%c0_22, %c8, %c0_23], %45 {strides = array<i32>} : memref<1x80x24xf32, #tpu.memory_space<vmem>>, vector<1x64x24xf32>,
    %c0_24 = arith.constant 0 : index
    %c0_25 = arith.constant 0 : index
    %c0_26 = arith.constant 0 : index
    %47 = vector.load %arg9[%c0_24, %c0_25, %c0_26] : memref<1x80x24xf32, #tpu.memory_space<vmem>>, vector<1x64x24xf32>
    %48 = vector.shape_cast %47 : vector<1x64x24xf32> to vector<64x24xf32>
    %c0_27 = arith.constant 0 : index
    %c0_28 = arith.constant 0 : index
    %c0_29 = arith.constant 0 : index
    %49 = vector.load %arg4[%c0_27, %c0_28, %c0_29] : memref<3x24x8xf32, #tpu.memory_space<vmem>>, vector<1x24x8xf32>
    %50 = vector.shape_cast %49 : vector<1x24x8xf32> to vector<24x8xf32>
    %cst_30 = arith.constant dense<0.000000e+00> : vector<64x8xf32>
    %51 = tpu.matmul %48, %50, %cst_30 {dimension_numbers = #tpu.dot_dimension_numbers<[1], [0], [0], [1], [0, 0, 1, 1], [], []>} : vector<64x24xf32>, vector<24x8xf32>, vector<64x8xf32> -> vector<64x8xf32>
    %c0_31 = arith.constant 0 : index
    %c8_32 = arith.constant 8 : index
    %c0_33 = arith.constant 0 : index
    %52 = vector.load %arg9[%c0_31, %c8_32, %c0_33] : memref<1x80x24xf32, #tpu.memory_space<vmem>>, vector<1x64x24xf32>
    %53 = vector.shape_cast %52 : vector<1x64x24xf32> to vector<64x24xf32>
    %c1 = arith.constant 1 : index
    %c0_34 = arith.constant 0 : index
    %c0_35 = arith.constant 0 : index
    %54 = vector.load %arg4[%c1, %c0_34, %c0_35] : memref<3x24x8xf32, #tpu.memory_space<vmem>>, vector<1x24x8xf32>
    %55 = vector.shape_cast %54 : vector<1x24x8xf32> to vector<24x8xf32>
    %cst_36 = arith.constant dense<0.000000e+00> : vector<64x8xf32>
    %56 = tpu.matmul %53, %55, %cst_36 {dimension_numbers = #tpu.dot_dimension_numbers<[1], [0], [0], [1], [0, 0, 1, 1], [], []>} : vector<64x24xf32>, vector<24x8xf32>, vector<64x8xf32> -> vector<64x8xf32>
    %57 = arith.addf %51, %56 : vector<64x8xf32>
    %c0_37 = arith.constant 0 : index
    %c16 = arith.constant 16 : index
    %c0_38 = arith.constant 0 : index
    %58 = vector.load %arg9[%c0_37, %c16, %c0_38] : memref<1x80x24xf32, #tpu.memory_space<vmem>>, vector<1x64x24xf32>
    %59 = vector.shape_cast %58 : vector<1x64x24xf32> to vector<64x24xf32>
    %c2 = arith.constant 2 : index
    %c0_39 = arith.constant 0 : index
    %c0_40 = arith.constant 0 : index
    %60 = vector.load %arg4[%c2, %c0_39, %c0_40] : memref<3x24x8xf32, #tpu.memory_space<vmem>>, vector<1x24x8xf32>
    %61 = vector.shape_cast %60 : vector<1x24x8xf32> to vector<24x8xf32>
    %cst_41 = arith.constant dense<0.000000e+00> : vector<64x8xf32>
    %62 = tpu.matmul %59, %61, %cst_41 {dimension_numbers = #tpu.dot_dimension_numbers<[1], [0], [0], [1], [0, 0, 1, 1], [], []>} : vector<64x24xf32>, vector<24x8xf32>, vector<64x8xf32> -> vector<64x8xf32>
    %63 = arith.addf %57, %62 : vector<64x8xf32>
    %c0_42 = arith.constant 0 : index
    %c0_43 = arith.constant 0 : index
    %64 = vector.load %arg5[%c0_42, %c0_43] : memref<1x8xf32, #tpu.memory_space<vmem>>, vector<1x8xf32>
    %65 = vector.broadcast %64 : vector<1x8xf32> to vector<64x8xf32>
    %66 = arith.addf %63, %65 : vector<64x8xf32>
    %cst_44 = arith.constant 0.000000e+00 : f32
    %67 = vector.broadcast %cst_44 : f32 to vector<64x8xf32>
    %68 = arith.maximumf %66, %67 : vector<64x8xf32>
    %c0_45 = arith.constant 0 : index
    %c0_46 = arith.constant 0 : index
    %69 = vector.load %arg6[%c0_45, %c0_46] : memref<8x32xf32, #tpu.memory_space<vmem>>, vector<8x32xf32>
    %cst_47 = arith.constant dense<0.000000e+00> : vector<64x32xf32>
    %70 = tpu.matmul %68, %69, %cst_47 {dimension_numbers = #tpu.dot_dimension_numbers<[1], [0], [0], [1], [0, 0, 1, 1], [], []>} : vector<64x8xf32>, vector<8x32xf32>, vector<64x32xf32> -> vector<64x32xf32>
    %c0_48 = arith.constant 0 : index
    %c0_49 = arith.constant 0 : index
    %71 = vector.load %arg7[%c0_48, %c0_49] : memref<1x32xf32, #tpu.memory_space<vmem>>, vector<1x32xf32>
    %72 = vector.broadcast %71 : vector<1x32xf32> to vector<64x32xf32>
    %73 = arith.addf %70, %72 : vector<64x32xf32>
    %74 = arith.addf %73, %1 : vector<64x32xf32>
    %cst_50 = arith.constant 0.000000e+00 : f32
    %75 = vector.broadcast %cst_50 : f32 to vector<64x32xf32>
    %76 = arith.maximumf %74, %75 : vector<64x32xf32>
    %77 = vector.shape_cast %76 : vector<64x32xf32> to vector<1x8x8x32xf32>
    %c0_51 = arith.constant 0 : index
    %c0_52 = arith.constant 0 : index
    %c0_53 = arith.constant 0 : index
    %c0_54 = arith.constant 0 : index
    %78 = vector.load %arg8[%c0_51, %c0_52, %c0_53, %c0_54] : memref<1x8x8x32xf32, #tpu.memory_space<vmem>>, vector<1x8x8x32xf32>
    tpu.vector_store %arg8[%c0_51, %c0_52, %c0_53, %c0_54], %77 {strides = array<i32>} : memref<1x8x8x32xf32, #tpu.memory_space<vmem>>, vector<1x8x8x32xf32>,
    return
  }
  func.func @transform_0(%arg0: i32) -> (i32, i32, i32, i32) {
    %c0_i32 = arith.constant 0 : i32
    %c0_i32_0 = arith.constant 0 : i32
    %c0_i32_1 = arith.constant 0 : i32
    %c0_i32_2 = arith.constant 0 : i32
    return %arg0, %c0_i32, %c0_i32_0, %c0_i32_1 : i32, i32, i32, i32
  }
  func.func @transform_1(%arg0: i32) -> (i32, i32) {
    %c0_i32 = arith.constant 0 : i32
    %c0_i32_0 = arith.constant 0 : i32
    %c0_i32_1 = arith.constant 0 : i32
    return %c0_i32, %c0_i32_0 : i32, i32
  }
  func.func @transform_2(%arg0: i32) -> (i32, i32) {
    %c0_i32 = arith.constant 0 : i32
    %c0_i32_0 = arith.constant 0 : i32
    %c0_i32_1 = arith.constant 0 : i32
    return %c0_i32, %c0_i32_0 : i32, i32
  }
  func.func @transform_3(%arg0: i32) -> (i32, i32, i32) {
    %c0_i32 = arith.constant 0 : i32
    %c0_i32_0 = arith.constant 0 : i32
    %c0_i32_1 = arith.constant 0 : i32
    %c0_i32_2 = arith.constant 0 : i32
    return %c0_i32, %c0_i32_0, %c0_i32_1 : i32, i32, i32
  }
  func.func @transform_4(%arg0: i32) -> (i32, i32) {
    %c0_i32 = arith.constant 0 : i32
    %c0_i32_0 = arith.constant 0 : i32
    %c0_i32_1 = arith.constant 0 : i32
    return %c0_i32, %c0_i32_0 : i32, i32
  }
  func.func @transform_5(%arg0: i32) -> (i32, i32) {
    %c0_i32 = arith.constant 0 : i32
    %c0_i32_0 = arith.constant 0 : i32
    %c0_i32_1 = arith.constant 0 : i32
    return %c0_i32, %c0_i32_0 : i32, i32
  }
  func.func @transform_6(%arg0: i32) -> (i32, i32) {
    %c0_i32 = arith.constant 0 : i32
    %c0_i32_0 = arith.constant 0 : i32
    %c0_i32_1 = arith.constant 0 : i32
    return %c0_i32, %c0_i32_0 : i32, i32
  }
  func.func @transform_7(%arg0: i32) -> (i32, i32, i32, i32) {
    %c0_i32 = arith.constant 0 : i32
    %c0_i32_0 = arith.constant 0 : i32
    %c0_i32_1 = arith.constant 0 : i32
    %c0_i32_2 = arith.constant 0 : i32
    return %arg0, %c0_i32, %c0_i32_0, %c0_i32_1 : i32, i32, i32, i32
  }
}

</mosaic_0001>

<llo_original>
// kernel: tpu_custom_call.1
$region0: #{tpu_custom_call.1}
  #allocation0 [shape = 'u32[]', space=smem, size = 0x4, offset = 0x4, fixed_abs, tag = 'smem constant byte address 0x4 - core index']
  #allocation1 [shape = 'u32[144,128]{1,0:T(1,128)}', space=vmem, size = 0x12000, scoped, tag = 'internal scratch']
  #allocation2 [shape = 'f32[1,80,24]{2,1,0:T(8,128)}', space=vmem, size = 0xa000, scoped, tag = 'scratch operand']
  %s0 = inlined_call_operand.hbm [shape: f32[2,8,8,32], index: 0, kind: input, shape index: {}]
  %s1 = inlined_call_operand.hbm [shape: f32[32,8], index: 1, kind: input, shape index: {}]
  %s2 = inlined_call_operand.hbm [shape: f32[1,8], index: 2, kind: input, shape index: {}]
  %s3 = inlined_call_operand.hbm [shape: f32[3,24,8], index: 3, kind: input, shape index: {}]
  %s4 = inlined_call_operand.hbm [shape: f32[1,8], index: 4, kind: input, shape index: {}]
  %s5 = inlined_call_operand.hbm [shape: f32[8,32], index: 5, kind: input, shape index: {}]
  %s6 = inlined_call_operand.hbm [shape: f32[1,32], index: 6, kind: input, shape index: {}]
  %s7 = inlined_call_operand.hbm [shape: f32[2,8,8,32], index: 7, kind: output, shape index: {}]
  %s8 = sld [smem:[#allocation0]]
  $region89: #{tpu_custom_call.1} parent=0
    _
  %s10 = ssub.s32 1, %s8
  %s11 = scalar_select 0, %s10, %s8
  $region1: #{tpu_custom_call.1} parent=0
    #allocation3 [shape = 'u8[65536]{0}', space=vmem, size = 0x10000, scoped, tag = 'input window, operand 0']
    #allocation4 [shape = 's32[2]{0}', space=sflag, size = 0x8, scoped, tag = 'scoped memory for tpu_custom_call.1']
    #allocation5 [shape = 's32[2]{0}', space=sflag, size = 0x8, scoped, tag = 'scoped memory for tpu_custom_call.1']
    #allocation6 [shape = 'u8[16384]{0}', space=vmem, size = 0x4000, scoped, tag = 'input window, operand 1, single buffered']
    #allocation7 [shape = 's32[1]{0}', space=sflag, size = 0x4, scoped, tag = 'scoped memory for tpu_custom_call.1']
    #allocation8 [shape = 'u8[512]{0}', space=vmem, size = 0x400, scoped, tag = 'input window, operand 2, single buffered']
    #allocation9 [shape = 'u8[36864]{0}', space=vmem, size = 0x9000, scoped, tag = 'input window, operand 3, single buffered']
    #allocation10 [shape = 's32[1]{0}', space=sflag, size = 0x4, scoped, tag = 'scoped memory for tpu_custom_call.1']
    #allocation11 [shape = 'u8[512]{0}', space=vmem, size = 0x400, scoped, tag = 'input window, operand 4, single buffered']
    #allocation12 [shape = 'u8[4096]{0}', space=vmem, size = 0x1000, scoped, tag = 'input window, operand 5, single buffered']
    #allocation13 [shape = 's32[1]{0}', space=sflag, size = 0x4, scoped, tag = 'scoped memory for tpu_custom_call.1']
    #allocation14 [shape = 'u8[512]{0}', space=vmem, size = 0x400, scoped, tag = 'input window, operand 6, single buffered']
    #allocation15 [shape = 'u8[65536]{0}', space=vmem, size = 0x10000, scoped, tag = 'output window, operand 0']
    %12 = vsyncpa [#allocation4], 0
    %s13 = scalar_lea.sflag [#allocation4], 1
    %14 = vsyncpa %s13, 0
    %15 = vsyncpa [#allocation7], 0
    %16 = vsyncpa [#allocation10], 0
    %17 = vsyncpa [#allocation13], 0
    %18 = vsyncpa [#allocation5], 0
    %s19 = scalar_lea.sflag [#allocation5], 1
    %20 = vsyncpa %s19, 0
    loop: start=0, step=1, limit=4
    $region2: #{tpu_custom_call.1} parent=1 // loop_pre_header
      _
    $region3: #{tpu_custom_call.1} parent=1 // loop_header
      %s22 = sphi 0, %s26
      %p23 = scmp.ge.s32.totalorder %s22, 4
      %s32 = sphi 0, %s34
      %s35 = sphi 0, %s32
      %s36 = sphi 0, %s35
      %s52 = sphi 0, %s36
      %s56 = sphi 0, %s56
      %s58 = sphi 0, %s56
      %s59 = sphi 0, %s58
      %s73 = sphi 0, %s59
      %s77 = sphi 0, %s77
      %s79 = sphi 0, %s77
      %s80 = sphi 0, %s79
      %s94 = sphi 0, %s80
      %s98 = sphi 0, %s98
      %s100 = sphi 0, %s98
      %s101 = sphi 0, %s100
      %s115 = sphi 0, %s101
      %s119 = sphi 0, %s119
      %s121 = sphi 0, %s119
      %s122 = sphi 0, %s121
      %s136 = sphi 0, %s122
      %s140 = sphi 0, %s140
      %s142 = sphi 0, %s140
      %s143 = sphi 0, %s142
      %s157 = sphi 0, %s143
      %s161 = sphi 0, %s161
      %s163 = sphi 0, %s161
      %s164 = sphi 0, %s163
      %s178 = sphi 0, %s164
      %s184 = sphi 0, %s186
      %s187 = sphi 0, %s184
      %s188 = sphi 0, %s187
      %s204 = sphi 0, %s188
    $region4: #{tpu_custom_call.1} parent=1 // loop_header_branch
      %25 = sbr.rel (%p23) target = $region8
    $region5: #{tpu_custom_call.1} parent=1 // loop_body
      %s27 = ssub.s32 %s22, 1
      %s28 = ssub.s32 %s22, 2
      %s29 = sadd.s32 %s22, 1
      %s30 = ssub.s32 %s22, %s29
      %p31 = scmp.eq.s32.totalorder %s30, 0
      %s33 = sadd.s32 %s32, 1
      %s34 = scalar_select %p31, %s32, %s33
      %p37 = pneg %p31
      %p38 = scmp.eq.s32.totalorder %s22, 1
      %p39 = por %p37, %p38
      %p40 = scmp.ne.s32.totalorder %s32, %s35
      %p41 = scmp.eq.s32.totalorder %s22, 0
      %p42 = por %p40, %p41
      %p43 = scmp.ne.s32.totalorder %s32, %s35
      %p44 = scmp.eq.s32.totalorder %s27, 1
      %p45 = por %p43, %p44
      %p46 = scmp.ne.s32.totalorder %s35, %s36
      %p47 = scmp.eq.s32.totalorder %s27, 0
      %p48 = por %p46, %p47
      %p49 = scmp.ne.s32.totalorder %s35, %s36
      %p50 = scmp.eq.s32.totalorder %s28, 1
      %p51 = por %p49, %p50
      %p53 = scmp.ne.s32.totalorder %s36, %s52
      %p54 = scmp.eq.s32.totalorder %s28, 0
      %p55 = por %p53, %p54
      %s57 = sadd.s32 %s56, 1
      %p60 = scmp.eq.s32.totalorder %s22, 1
      %p61 = scmp.ne.s32.totalorder %s56, %s58
      %p62 = scmp.eq.s32.totalorder %s22, 0
      %p63 = por %p61, %p62
      %p64 = scmp.ne.s32.totalorder %s56, %s58
      %p65 = scmp.eq.s32.totalorder %s27, 1
      %p66 = por %p64, %p65
      %p67 = scmp.ne.s32.totalorder %s58, %s59
      %p68 = scmp.eq.s32.totalorder %s27, 0
      %p69 = por %p67, %p68
      %p70 = scmp.ne.s32.totalorder %s58, %s59
      %p71 = scmp.eq.s32.totalorder %s28, 1
      %p72 = por %p70, %p71
      %p74 = scmp.ne.s32.totalorder %s59, %s73
      %p75 = scmp.eq.s32.totalorder %s28, 0
      %p76 = por %p74, %p75
      %s78 = sadd.s32 %s77, 1
      %p81 = scmp.eq.s32.totalorder %s22, 1
      %p82 = scmp.ne.s32.totalorder %s77, %s79
      %p83 = scmp.eq.s32.totalorder %s22, 0
      %p84 = por %p82, %p83
      %p85 = scmp.ne.s32.totalorder %s77, %s79
      %p86 = scmp.eq.s32.totalorder %s27, 1
      %p87 = por %p85, %p86
      %p88 = scmp.ne.s32.totalorder %s79, %s80
      %p89 = scmp.eq.s32.totalorder %s27, 0
      %p90 = por %p88, %p89
      %p91 = scmp.ne.s32.totalorder %s79, %s80
      %p92 = scmp.eq.s32.totalorder %s28, 1
      %p93 = por %p91, %p92
      %p95 = scmp.ne.s32.totalorder %s80, %s94
      %p96 = scmp.eq.s32.totalorder %s28, 0
      %p97 = por %p95, %p96
      %s99 = sadd.s32 %s98, 1
      %p102 = scmp.eq.s32.totalorder %s22, 1
      %p103 = scmp.ne.s32.totalorder %s98, %s100
      %p104 = scmp.eq.s32.totalorder %s22, 0
      %p105 = por %p103, %p104
      %p106 = scmp.ne.s32.totalorder %s98, %s100
      %p107 = scmp.eq.s32.totalorder %s27, 1
      %p108 = por %p106, %p107
      %p109 = scmp.ne.s32.totalorder %s100, %s101
      %p110 = scmp.eq.s32.totalorder %s27, 0
      %p111 = por %p109, %p110
      %p112 = scmp.ne.s32.totalorder %s100, %s101
      %p113 = scmp.eq.s32.totalorder %s28, 1
      %p114 = por %p112, %p113
      %p116 = scmp.ne.s32.totalorder %s101, %s115
      %p117 = scmp.eq.s32.totalorder %s28, 0
      %p118 = por %p116, %p117
      %s120 = sadd.s32 %s119, 1
      %p123 = scmp.eq.s32.totalorder %s22, 1
      %p124 = scmp.ne.s32.totalorder %s119, %s121
      %p125 = scmp.eq.s32.totalorder %s22, 0
      %p126 = por %p124, %p125
      %p127 = scmp.ne.s32.totalorder %s119, %s121
      %p128 = scmp.eq.s32.totalorder %s27, 1
      %p129 = por %p127, %p128
      %p130 = scmp.ne.s32.totalorder %s121, %s122
      %p131 = scmp.eq.s32.totalorder %s27, 0
      %p132 = por %p130, %p131
      %p133 = scmp.ne.s32.totalorder %s121, %s122
      %p134 = scmp.eq.s32.totalorder %s28, 1
      %p135 = por %p133, %p134
      %p137 = scmp.ne.s32.totalorder %s122, %s136
      %p138 = scmp.eq.s32.totalorder %s28, 0
      %p139 = por %p137, %p138
      %s141 = sadd.s32 %s140, 1
      %p144 = scmp.eq.s32.totalorder %s22, 1
      %p145 = scmp.ne.s32.totalorder %s140, %s142
      %p146 = scmp.eq.s32.totalorder %s22, 0
      %p147 = por %p145, %p146
      %p148 = scmp.ne.s32.totalorder %s140, %s142
      %p149 = scmp.eq.s32.totalorder %s27, 1
      %p150 = por %p148, %p149
      %p151 = scmp.ne.s32.totalorder %s142, %s143
      %p152 = scmp.eq.s32.totalorder %s27, 0
      %p153 = por %p151, %p152
      %p154 = scmp.ne.s32.totalorder %s142, %s143
      %p155 = scmp.eq.s32.totalorder %s28, 1
      %p156 = por %p154, %p155
      %p158 = scmp.ne.s32.totalorder %s143, %s157
      %p159 = scmp.eq.s32.totalorder %s28, 0
      %p160 = por %p158, %p159
      %s162 = sadd.s32 %s161, 1
      %p165 = scmp.eq.s32.totalorder %s22, 1
      %p166 = scmp.ne.s32.totalorder %s161, %s163
      %p167 = scmp.eq.s32.totalorder %s22, 0
      %p168 = por %p166, %p167
      %p169 = scmp.ne.s32.totalorder %s161, %s163
      %p170 = scmp.eq.s32.totalorder %s27, 1
      %p171 = por %p169, %p170
      %p172 = scmp.ne.s32.totalorder %s163, %s164
      %p173 = scmp.eq.s32.totalorder %s27, 0
      %p174 = por %p172, %p173
      %p175 = scmp.ne.s32.totalorder %s163, %s164
      %p176 = scmp.eq.s32.totalorder %s28, 1
      %p177 = por %p175, %p176
      %p179 = scmp.ne.s32.totalorder %s164, %s178
      %p180 = scmp.eq.s32.totalorder %s28, 0
      %p181 = por %p179, %p180
      %s182 = ssub.s32 %s22, %s29
      %p183 = scmp.eq.s32.totalorder %s182, 0
      %s185 = sadd.s32 %s184, 1
      %s186 = scalar_select %p183, %s184, %s185
      %p189 = pneg %p183
      %p190 = scmp.eq.s32.totalorder %s22, 1
      %p191 = por %p189, %p190
      %p192 = scmp.ne.s32.totalorder %s184, %s187
      %p193 = scmp.eq.s32.totalorder %s22, 0
      %p194 = por %p192, %p193
      %p195 = scmp.ne.s32.totalorder %s184, %s187
      %p196 = scmp.eq.s32.totalorder %s27, 1
      %p197 = por %p195, %p196
      %p198 = scmp.ne.s32.totalorder %s187, %s188
      %p199 = scmp.eq.s32.totalorder %s27, 0
      %p200 = por %p198, %p199
      %p201 = scmp.ne.s32.totalorder %s187, %s188
      %p202 = scmp.eq.s32.totalorder %s28, 1
      %p203 = por %p201, %p202
      %p205 = scmp.ne.s32.totalorder %s188, %s204
      %p206 = scmp.eq.s32.totalorder %s28, 0
      %p207 = por %p205, %p206
      %p208 = scmp.le.s32.totalorder 1, %s22
      %p209 = scmp.lt.s32.totalorder %s22, 3
      %p210 = pnand %p208, %p209
      %p211 = pneg %p210
      // Predicated region
      $region9: #{tpu_custom_call.1} parent=5 // pred_check
        _
      $region10: #{tpu_custom_call.1} parent=5 // pred_check_branch
        %213 = sbr.rel (%p210) target = $region12
      $region11: #{tpu_custom_call.1} parent=5 // pred_region
        %s214 = ssub.s32 %s22, 1
        // Predicated region
        $region13: #{tpu_custom_call.1} parent=11 // pred_check
          %p215 = pneg %p69
        $region14: #{tpu_custom_call.1} parent=11 // pred_check_branch
          %217 = sbr.rel (%p215) target = $region16
        $region15: #{tpu_custom_call.1} parent=11 // pred_region
          %s219 = ssub.s32 512, 512
          %220 = vsyncadd [#allocation7], %s219
          %s221 = sshll.u32 [#allocation6], 4
          %s222 = int_to_ptr.vmem [resolvable:$true] %s221
          %227 = dma.hbm_to_vmem [thread:$0]  %s1, 512, %s222, [#allocation7], 128, 128, 8
        $region16: #{tpu_custom_call.1} parent=11 // pred_fallthru
          _
        // Predicated region
        $region17: #{tpu_custom_call.1} parent=11 // pred_check
          %p228 = pneg %p90
        $region18: #{tpu_custom_call.1} parent=11 // pred_check_branch
          %230 = sbr.rel (%p228) target = $region20
        $region19: #{tpu_custom_call.1} parent=11 // pred_region
          %s232 = ssub.s32 16, 16
          %233 = vsyncadd [#allocation7], %s232
          %s235 = sshll.u32 [#allocation8], 4
          %s236 = int_to_ptr.vmem [resolvable:$true] %s235
          %238 = dma.hbm_to_vmem [thread:$0]  %s2, 16, %s236, [#allocation7]
        $region20: #{tpu_custom_call.1} parent=11 // pred_fallthru
          _
        // Predicated region
        $region21: #{tpu_custom_call.1} parent=11 // pred_check
          %p239 = pneg %p111
        $region22: #{tpu_custom_call.1} parent=11 // pred_check_branch
          %241 = sbr.rel (%p239) target = $region24
        $region23: #{tpu_custom_call.1} parent=11 // pred_region
          %s243 = ssub.s32 1152, 1152
          %244 = vsyncadd [#allocation10], %s243
          %s245 = sshll.u32 [#allocation9], 4
          %s246 = int_to_ptr.vmem [resolvable:$true] %s245
          %251 = dma.hbm_to_vmem [thread:$0]  %s3, 1152, %s246, [#allocation10], 128, 128, 8
        $region24: #{tpu_custom_call.1} parent=11 // pred_fallthru
          _
        // Predicated region
        $region25: #{tpu_custom_call.1} parent=11 // pred_check
          %p252 = pneg %p132
        $region26: #{tpu_custom_call.1} parent=11 // pred_check_branch
          %254 = sbr.rel (%p252) target = $region28
        $region27: #{tpu_custom_call.1} parent=11 // pred_region
          %s256 = ssub.s32 16, 16
          %257 = vsyncadd [#allocation10], %s256
          %s259 = sshll.u32 [#allocation11], 4
          %s260 = int_to_ptr.vmem [resolvable:$true] %s259
          %262 = dma.hbm_to_vmem [thread:$0]  %s4, 16, %s260, [#allocation10]
        $region28: #{tpu_custom_call.1} parent=11 // pred_fallthru
          _
        // Predicated region
        $region29: #{tpu_custom_call.1} parent=11 // pred_check
          %p263 = pneg %p153
        $region30: #{tpu_custom_call.1} parent=11 // pred_check_branch
          %265 = sbr.rel (%p263) target = $region32
        $region31: #{tpu_custom_call.1} parent=11 // pred_region
          %s267 = ssub.s32 128, 128
          %268 = vsyncadd [#allocation13], %s267
          %s270 = sshll.u32 [#allocation12], 4
          %s271 = int_to_ptr.vmem [resolvable:$true] %s270
          %273 = dma.hbm_to_vmem [thread:$0]  %s5, 128, %s271, [#allocation13]
        $region32: #{tpu_custom_call.1} parent=11 // pred_fallthru
          _
        // Predicated region
        $region33: #{tpu_custom_call.1} parent=11 // pred_check
          %p274 = pneg %p174
        $region34: #{tpu_custom_call.1} parent=11 // pred_check_branch
          %276 = sbr.rel (%p274) target = $region36
        $region35: #{tpu_custom_call.1} parent=11 // pred_region
          %s278 = ssub.s32 16, 16
          %279 = vsyncadd [#allocation13], %s278
          %s281 = sshll.u32 [#allocation14], 4
          %s282 = int_to_ptr.vmem [resolvable:$true] %s281
          %284 = dma.hbm_to_vmem [thread:$0]  %s6, 16, %s282, [#allocation13]
        $region36: #{tpu_custom_call.1} parent=11 // pred_fallthru
          _
      $region12: #{tpu_custom_call.1} parent=5 // pred_fallthru
        _
      %p285 = scmp.lt.s32.totalorder %s22, 2
      // Predicated region
      $region37: #{tpu_custom_call.1} parent=5 // pred_check
        %p286 = pneg %p285
      $region38: #{tpu_custom_call.1} parent=5 // pred_check_branch
        %288 = sbr.rel (%p286) target = $region40
      $region39: #{tpu_custom_call.1} parent=5 // pred_region
        // Predicated region
        $region41: #{tpu_custom_call.1} parent=39 // pred_check
          %p289 = pneg %p42
        $region42: #{tpu_custom_call.1} parent=39 // pred_check_branch
          %291 = sbr.rel (%p289) target = $region44
        $region43: #{tpu_custom_call.1} parent=39 // pred_region
          %s292 = sand.u32 %s32, 1
          %s293 = scalar_lea.sflag [#allocation4], %s292
          %s294 = sand.u32 %s32, 1
          %s295 = smul.addr %s294, 64
          %s296 = scalar_lea.vmem [#allocation3], %s295
          %s298 = ssub.s32 1024, 1024
          %299 = vsyncadd %s293, %s298
          %s300 = smul.addr %s22, 8
          %s301 = smul.addr %s300, 128
          %s302 = scalar_lea.hbm %s0, %s301
          %s303 = sshll.u32 %s296, 4
          %s304 = int_to_ptr.vmem [resolvable:$true] %s303
          %309 = dma.hbm_to_vmem [thread:$0]  %s302, 1024, %s304, %s293, 128, 128, 8
        $region44: #{tpu_custom_call.1} parent=39 // pred_fallthru
          _
      $region40: #{tpu_custom_call.1} parent=5 // pred_fallthru
        _
      %p310 = scmp.le.s32.totalorder 1, %s22
      %p311 = scmp.lt.s32.totalorder %s22, 3
      %p312 = pnand %p310, %p311
      %p313 = pneg %p312
      // Predicated region
      $region45: #{tpu_custom_call.1} parent=5 // pred_check
        _
      $region46: #{tpu_custom_call.1} parent=5 // pred_check_branch
        %315 = sbr.rel (%p312) target = $region48
      $region47: #{tpu_custom_call.1} parent=5 // pred_region
        %s316 = ssub.s32 %s22, 1
        %s317 = sand.u32 %s35, 1
        %s318 = scalar_lea.sflag [#allocation4], %s317
        %s319 = sand.u32 %s35, 1
        %s320 = smul.addr %s319, 64
        %s321 = scalar_lea.vmem [#allocation3], %s320
        // Predicated region
        $region49: #{tpu_custom_call.1} parent=47 // pred_check
          %p322 = pneg %p48
        $region50: #{tpu_custom_call.1} parent=47 // pred_check_branch
          %324 = sbr.rel (%p322) target = $region52
        $region51: #{tpu_custom_call.1} parent=47 // pred_region
          %325 = dma.done %s318, 1024
        $region52: #{tpu_custom_call.1} parent=47 // pred_fallthru
          _
        // Predicated region
        $region53: #{tpu_custom_call.1} parent=47 // pred_check
          %p326 = pneg %p69
        $region54: #{tpu_custom_call.1} parent=47 // pred_check_branch
          %328 = sbr.rel (%p326) target = $region56
        $region55: #{tpu_custom_call.1} parent=47 // pred_region
          %329 = dma.done [#allocation7], 512
        $region56: #{tpu_custom_call.1} parent=47 // pred_fallthru
          _
        // Predicated region
        $region57: #{tpu_custom_call.1} parent=47 // pred_check
          %p330 = pneg %p90
        $region58: #{tpu_custom_call.1} parent=47 // pred_check_branch
          %332 = sbr.rel (%p330) target = $region60
        $region59: #{tpu_custom_call.1} parent=47 // pred_region
          %333 = dma.done [#allocation7], 16
        $region60: #{tpu_custom_call.1} parent=47 // pred_fallthru
          _
        // Predicated region
        $region61: #{tpu_custom_call.1} parent=47 // pred_check
          %p334 = pneg %p111
        $region62: #{tpu_custom_call.1} parent=47 // pred_check_branch
          %336 = sbr.rel (%p334) target = $region64
        $region63: #{tpu_custom_call.1} parent=47 // pred_region
          %337 = dma.done [#allocation10], 1152
        $region64: #{tpu_custom_call.1} parent=47 // pred_fallthru
          _
        // Predicated region
        $region65: #{tpu_custom_call.1} parent=47 // pred_check
          %p338 = pneg %p132
        $region66: #{tpu_custom_call.1} parent=47 // pred_check_branch
          %340 = sbr.rel (%p338) target = $region68
        $region67: #{tpu_custom_call.1} parent=47 // pred_region
          %341 = dma.done [#allocation10], 16
        $region68: #{tpu_custom_call.1} parent=47 // pred_fallthru
          _
        // Predicated region
        $region69: #{tpu_custom_call.1} parent=47 // pred_check
          %p342 = pneg %p153
        $region70: #{tpu_custom_call.1} parent=47 // pred_check_branch
          %344 = sbr.rel (%p342) target = $region72
        $region71: #{tpu_custom_call.1} parent=47 // pred_region
          %345 = dma.done [#allocation13], 128
        $region72: #{tpu_custom_call.1} parent=47 // pred_fallthru
          _
        // Predicated region
        $region73: #{tpu_custom_call.1} parent=47 // pred_check
          %p346 = pneg %p174
        $region74: #{tpu_custom_call.1} parent=47 // pred_check_branch
          %348 = sbr.rel (%p346) target = $region76
        $region75: #{tpu_custom_call.1} parent=47 // pred_region
          %349 = dma.done [#allocation13], 16
        $region76: #{tpu_custom_call.1} parent=47 // pred_fallthru
          _
        %s350 = sand.u32 %s35, 1
        %s351 = scalar_lea.sflag [#allocation4], %s350
        %s352 = sand.u32 %s35, 1
        %s353 = smul.addr %s352, 64
        %s354 = scalar_lea.vmem [#allocation3], %s353
        %p355 = pneg %p48
        %p356 = pneg %p45
        %p357 = pneg %p69
        %p358 = pneg %p66
        %p359 = pneg %p90
        %p360 = pneg %p87
        %p361 = pneg %p111
        %p362 = pneg %p108
        %p363 = pneg %p132
        %p364 = pneg %p129
        %p365 = pneg %p153
        %p366 = pneg %p150
        %p367 = pneg %p174
        %p368 = pneg %p171
        %p369 = pneg %p200
        %p370 = pneg %p197
        %s371 = sand.u32 %s187, 1
        %s372 = scalar_lea.sflag [#allocation5], %s371
        %s373 = sand.u32 %s187, 1
        %s374 = smul.addr %s373, 64
        %s375 = scalar_lea.vmem [#allocation15], %s374
        %v376 = vld [vmem:[%s321] sm:$0xff]
        %v377 = vld [vmem:[%s321 + $0x8] sm:$0xff]
        %v378 = vld [vmem:[%s321 + $0x10] sm:$0xff]
        %v379 = vld [vmem:[%s321 + $0x18] sm:$0xff]
        %v380 = vld [vmem:[%s321 + $0x20] sm:$0xff]
        %v381 = vld [vmem:[%s321 + $0x28] sm:$0xff]
        %v382 = vld [vmem:[%s321 + $0x30] sm:$0xff]
        %v383 = vld [vmem:[%s321 + $0x38] sm:$0xff]
        %v384 = vld [vmem:[#allocation6] sm:$0xff]
        %v385 = vld [vmem:[#allocation6 + $0x8] sm:$0xff]
        %v386 = vld [vmem:[#allocation6 + $0x10] sm:$0xff]
        %v387 = vld [vmem:[#allocation6 + $0x18] sm:$0xff]
        %v388 = vld [vmem:[#allocation8] sm:$0x1]
        %v390 = vlaneseq
        %v391 = vshrl.u32 %v390, 7
        %v392 = vsub.s32 0, %v391
        %v393 = vrot.slane %v388, %v392
        %vm395 = vcmask 261120
        %v397 = vsel %vm395, %v376, 0
        %v400 = vsel %vm395, %v377, 0
        %v403 = vsel %vm395, %v378, 0
        %v406 = vsel %vm395, %v379, 0
        %v409 = vsel %vm395, %v380, 0
        %v412 = vsel %vm395, %v381, 0
        %v415 = vsel %vm395, %v382, 0
        %v418 = vsel %vm395, %v383, 0
        %420 = vmatprep.subr.mxu0 0.0
        %421 = vmatpush1.msra.mxu0 %v384
        %422 = vmatprep.subr.mxu0 0.0
        %423 = vmatpush1.msra.mxu0 %v385
        %424 = vmatprep.subr.mxu0 0.0
        %425 = vmatpush1.msra.mxu0 %v386
        %426 = vmatprep.subr.mxu0 0.0
        %427 = vmatpush1.msra.mxu0 %v387
        %428 = vmatprep.subr.mxu0 0.0
        %429 = vmatpush1.msra.mxu0 0.0
        %430 = vmatprep.subr.mxu0 0.0
        %431 = vmatpush1.msra.mxu0 0.0
        %432 = vmatprep.subr.mxu0 0.0
        %433 = vmatpush1.msra.mxu0 0.0
        %434 = vmatprep.subr.mxu0 0.0
        %435 = vmatpush1.msra.mxu0 0.0
        %436 = vmatprep.subr.mxu0 0.0
        %437 = vmatpush1.msra.mxu0 0.0
        %438 = vmatprep.subr.mxu0 0.0
        %439 = vmatpush1.msra.mxu0 0.0
        %440 = vmatprep.subr.mxu0 0.0
        %441 = vmatpush1.msra.mxu0 0.0
        %442 = vmatprep.subr.mxu0 0.0
        %443 = vmatpush1.msra.mxu0 0.0
        %444 = vmatprep.subr.mxu0 0.0
        %445 = vmatpush1.msra.mxu0 0.0
        %446 = vmatprep.subr.mxu0 0.0
        %447 = vmatpush1.msra.mxu0 0.0
        %448 = vmatprep.subr.mxu0 0.0
        %449 = vmatpush1.msra.mxu0 0.0
        %450 = vmatprep.subr.mxu0 0.0
        %451 = vmatpush1.msra.mxu0 0.0
        %452 = vmatprep.subr.mxu0 0.0
        %453 = vmatpush1.msra.mxu0 0.0
        %454 = vmatprep.subr.mxu0 0.0
        %455 = vmatpush1.msra.mxu0 0.0
        %456 = vmatprep.subr.mxu0 0.0
        %457 = vmatpush1.msra.mxu0 0.0
        %458 = vmatprep.subr.mxu0 0.0
        %459 = vmatpush1.msra.mxu0 0.0
        %460 = vmatprep.subr.mxu0 0.0
        %461 = vmatpush1.msra.mxu0 0.0
        %462 = vmatprep.subr.mxu0 0.0
        %463 = vmatpush1.msra.mxu0 0.0
        %464 = vmatprep.subr.mxu0 0.0
        %465 = vmatpush1.msra.mxu0 0.0
        %466 = vmatprep.subr.mxu0 0.0
        %467 = vmatpush1.msra.mxu0 0.0
        %468 = vmatprep.subr.mxu0 0.0
        %469 = vmatpush1.msra.mxu0 0.0
        %470 = vmatprep.subr.mxu0 0.0
        %471 = vmatpush1.msra.mxu0 0.0
        %472 = vmatprep.subr.mxu0 0.0
        %473 = vmatpush1.msra.mxu0 0.0
        %474 = vmatprep.subr.mxu0 0.0
        %475 = vmatpush1.msra.mxu0 0.0
        %476 = vmatprep.subr.mxu0 0.0
        %477 = vmatpush1.msra.mxu0 0.0
        %478 = vmatprep.subr.mxu0 0.0
        %479 = vmatpush1.msra.mxu0 0.0
        %480 = vmatprep.subr.mxu0 0.0
        %481 = vmatpush1.msra.mxu0 0.0
        %482 = vmatprep.subr.mxu0 0.0
        %483 = vmatpush1.msra.mxu0 0.0
        %484 = vmatprep.mubr.f32.mxu0 0.0
        %485 = vmatmul.mubr.f32.gmra.mrb[0].mxu0 %v397
        %v486 = vpop.f32.mrb[0].mxu0
        %v487 = vadd.f32 %v393, %v486
        %v488 = vpop.f32.mrb[0].mxu0
        %489 = vmatprep.mubr.f32.mxu0 0.0
        %490 = vmatmul.mubr.f32.gmra.mrb[0].mxu0 %v400
        %v491 = vpop.f32.mrb[0].mxu0
        %v492 = vadd.f32 %v393, %v491
        %v493 = vpop.f32.mrb[0].mxu0
        %494 = vmatprep.mubr.f32.mxu0 0.0
        %495 = vmatmul.mubr.f32.gmra.mrb[0].mxu0 %v403
        %v496 = vpop.f32.mrb[0].mxu0
        %v497 = vadd.f32 %v393, %v496
        %v498 = vpop.f32.mrb[0].mxu0
        %499 = vmatprep.mubr.f32.mxu0 0.0
        %500 = vmatmul.mubr.f32.gmra.mrb[0].mxu0 %v406
        %v501 = vpop.f32.mrb[0].mxu0
        %v502 = vadd.f32 %v393, %v501
        %v503 = vpop.f32.mrb[0].mxu0
        %504 = vmatprep.mubr.f32.mxu0 0.0
        %505 = vmatmul.mubr.f32.gmra.mrb[0].mxu0 %v409
        %v506 = vpop.f32.mrb[0].mxu0
        %v507 = vadd.f32 %v393, %v506
        %v508 = vpop.f32.mrb[0].mxu0
        %509 = vmatprep.mubr.f32.mxu0 0.0
        %510 = vmatmul.mubr.f32.gmra.mrb[0].mxu0 %v412
        %v511 = vpop.f32.mrb[0].mxu0
        %v512 = vadd.f32 %v393, %v511
        %v513 = vpop.f32.mrb[0].mxu0
        %514 = vmatprep.mubr.f32.mxu0 0.0
        %515 = vmatmul.mubr.f32.gmra.mrb[0].mxu0 %v415
        %v516 = vpop.f32.mrb[0].mxu0
        %v517 = vadd.f32 %v393, %v516
        %v518 = vpop.f32.mrb[0].mxu0
        %519 = vmatprep.mubr.f32.mxu0 0.0
        %520 = vmatmul.mubr.f32.gmra.mrb[0].mxu0 %v418
        %v521 = vpop.f32.mrb[0].mxu0
        %v522 = vadd.f32 %v393, %v521
        %v523 = vpop.f32.mrb[0].mxu0
        %524 = vdwg.mxu0
        %v525 = vmax.f32 %v487, 0.0
        %v526 = vmax.f32 %v492, 0.0
        %v527 = vmax.f32 %v497, 0.0
        %v528 = vmax.f32 %v502, 0.0
        %v529 = vmax.f32 %v507, 0.0
        %v530 = vmax.f32 %v512, 0.0
        %v531 = vmax.f32 %v517, 0.0
        %v532 = vmax.f32 %v522, 0.0
        %v533 = vlaneseq
        %v534 = vshrl.u32 %v533, 7
        %v535 = vadd.s32 %v534, 8
        %v536 = vadd.s32 %v534, 16
        %v537 = vadd.s32 %v534, 24
        %v538 = vadd.s32 %v534, 32
        %v539 = vadd.s32 %v534, 40
        %v540 = vadd.s32 %v534, 48
        %v541 = vadd.s32 %v534, 56
        %vm542 = vcmp.lt.s32.totalorder %v534, 0
        %v543 = vsub.s32 0, %v534
        %v544 = vsel %vm542, %v543, %v534
        %v545 = vshrl.u32 %v544, 3
        %v546 = vand.u32 %v544, 7
        %v547 = vsub.s32 0, %v546
        %v548 = vsel %vm542, %v547, %v546
        %vm549 = vcmp.lt.s32.totalorder %v535, 0
        %v550 = vsub.s32 0, %v535
        %v551 = vsel %vm549, %v550, %v535
        %v552 = vshrl.u32 %v551, 3
        %v553 = vand.u32 %v551, 7
        %v554 = vsub.s32 0, %v553
        %v555 = vsel %vm549, %v554, %v553
        %vm556 = vcmp.lt.s32.totalorder %v536, 0
        %v557 = vsub.s32 0, %v536
        %v558 = vsel %vm556, %v557, %v536
        %v559 = vshrl.u32 %v558, 3
        %v560 = vand.u32 %v558, 7
        %v561 = vsub.s32 0, %v560
        %v562 = vsel %vm556, %v561, %v560
        %vm563 = vcmp.lt.s32.totalorder %v537, 0
        %v564 = vsub.s32 0, %v537
        %v565 = vsel %vm563, %v564, %v537
        %v566 = vshrl.u32 %v565, 3
        %v567 = vand.u32 %v565, 7
        %v568 = vsub.s32 0, %v567
        %v569 = vsel %vm563, %v568, %v567
        %vm570 = vcmp.lt.s32.totalorder %v538, 0
        %v571 = vsub.s32 0, %v538
        %v572 = vsel %vm570, %v571, %v538
        %v573 = vshrl.u32 %v572, 3
        %v574 = vand.u32 %v572, 7
        %v575 = vsub.s32 0, %v574
        %v576 = vsel %vm570, %v575, %v574
        %vm577 = vcmp.lt.s32.totalorder %v539, 0
        %v578 = vsub.s32 0, %v539
        %v579 = vsel %vm577, %v578, %v539
        %v580 = vshrl.u32 %v579, 3
        %v581 = vand.u32 %v579, 7
        %v582 = vsub.s32 0, %v581
        %v583 = vsel %vm577, %v582, %v581
        %vm584 = vcmp.lt.s32.totalorder %v540, 0
        %v585 = vsub.s32 0, %v540
        %v586 = vsel %vm584, %v585, %v540
        %v587 = vshrl.u32 %v586, 3
        %v588 = vand.u32 %v586, 7
        %v589 = vsub.s32 0, %v588
        %v590 = vsel %vm584, %v589, %v588
        %vm591 = vcmp.lt.s32.totalorder %v541, 0
        %v592 = vsub.s32 0, %v541
        %v593 = vsel %vm591, %v592, %v541
        %v594 = vshrl.u32 %v593, 3
        %v595 = vand.u32 %v593, 7
        %v596 = vsub.s32 0, %v595
        %v597 = vsel %vm591, %v596, %v595
        %vm598 = vcmp.ne.s32.totalorder %v548, 0
        %vm599 = vcmp.ne.s32.totalorder %v555, 0
        %vm600 = vcmp.ne.s32.totalorder %v562, 0
        %vm601 = vcmp.ne.s32.totalorder %v569, 0
        %vm602 = vcmp.ne.s32.totalorder %v576, 0
        %vm603 = vcmp.ne.s32.totalorder %v583, 0
        %vm604 = vcmp.ne.s32.totalorder %v590, 0
        %vm605 = vcmp.ne.s32.totalorder %v597, 0
        %vm606 = vcmp.lt.s32.totalorder %v548, 0
        %vm607 = vcmp.lt.s32.totalorder %v555, 0
        %vm608 = vcmp.lt.s32.totalorder %v562, 0
        %vm609 = vcmp.lt.s32.totalorder %v569, 0
        %vm610 = vcmp.lt.s32.totalorder %v576, 0
        %vm611 = vcmp.lt.s32.totalorder %v583, 0
        %vm612 = vcmp.lt.s32.totalorder %v590, 0
        %vm613 = vcmp.lt.s32.totalorder %v597, 0
        %vm614 = vmand %vm606, %vm598
        %vm615 = vmand %vm607, %vm599
        %vm616 = vmand %vm608, %vm600
        %vm617 = vmand %vm609, %vm601
        %vm618 = vmand %vm610, %vm602
        %vm619 = vmand %vm611, %vm603
        %vm620 = vmand %vm612, %vm604
        %vm621 = vmand %vm613, %vm605
        %v622 = vadd.s32 %v548, 8
        %v623 = vadd.s32 %v555, 8
        %v624 = vadd.s32 %v562, 8
        %v625 = vadd.s32 %v569, 8
        %v626 = vadd.s32 %v576, 8
        %v627 = vadd.s32 %v583, 8
        %v628 = vadd.s32 %v590, 8
        %v629 = vadd.s32 %v597, 8
        %v630 = vsel %vm614, %v622, %v548
        %v631 = vsel %vm615, %v623, %v555
        %v632 = vsel %vm616, %v624, %v562
        %v633 = vsel %vm617, %v625, %v569
        %v634 = vsel %vm618, %v626, %v576
        %v635 = vsel %vm619, %v627, %v583
        %v636 = vsel %vm620, %v628, %v590
        %v637 = vsel %vm621, %v629, %v597
        %vm638 = vcmp.ne.s32.totalorder %v630, 0
        %vm639 = vcmp.ne.s32.totalorder %v631, 0
        %vm640 = vcmp.ne.s32.totalorder %v632, 0
        %vm641 = vcmp.ne.s32.totalorder %v633, 0
        %vm642 = vcmp.ne.s32.totalorder %v634, 0
        %vm643 = vcmp.ne.s32.totalorder %v635, 0
        %vm644 = vcmp.ne.s32.totalorder %v636, 0
        %vm645 = vcmp.ne.s32.totalorder %v637, 0
        %v646 = vrot.slane %v525, 7
        %v647 = vrot.slane %v526, 7
        %v648 = vrot.slane %v527, 7
        %v649 = vrot.slane %v528, 7
        %v650 = vrot.slane %v529, 7
        %v651 = vrot.slane %v530, 7
        %v652 = vrot.slane %v531, 7
        %v653 = vrot.slane %v532, 7
        %vm654 = vcmp.lt.s32.totalorder %v534, 1
        %v655 = vsel %vm654, %v652, %v653
        %v656 = vsel %vm654, %v651, %v652
        %v657 = vsel %vm654, %v650, %v651
        %v658 = vsel %vm654, %v649, %v650
        %v659 = vsel %vm654, %v648, %v649
        %v660 = vsel %vm654, %v647, %v648
        %v661 = vsel %vm654, %v646, %v647
        %v662 = vsel %vm654, %v653, %v646
        %v663 = vsel %vm638, 1, 0
        %v664 = vsel %vm639, 1, 0
        %v665 = vsel %vm640, 1, 0
        %v666 = vsel %vm641, 1, 0
        %v667 = vsel %vm642, 1, 0
        %v668 = vsel %vm643, 1, 0
        %v669 = vsel %vm644, 1, 0
        %v670 = vsel %vm645, 1, 0
        %vm671 = vcmp.eq.s32.totalorder %v663, 1
        %vm672 = vcmp.eq.s32.totalorder %v664, 1
        %vm673 = vcmp.eq.s32.totalorder %v665, 1
        %vm674 = vcmp.eq.s32.totalorder %v666, 1
        %vm675 = vcmp.eq.s32.totalorder %v667, 1
        %vm676 = vcmp.eq.s32.totalorder %v668, 1
        %vm677 = vcmp.eq.s32.totalorder %v669, 1
        %vm678 = vcmp.eq.s32.totalorder %v670, 1
        %v679 = vsel %vm671, %v662, 0.0
        %v680 = vsel %vm672, %v661, 0.0
        %v681 = vsel %vm673, %v660, 0.0
        %v682 = vsel %vm674, %v659, 0.0
        %v683 = vsel %vm675, %v658, 0.0
        %v684 = vsel %vm676, %v657, 0.0
        %v685 = vsel %vm677, %v656, 0.0
        %v686 = vsel %vm678, %v655, 0.0
        %vm687 = vcmp.ne.s32.totalorder %v630, 7
        %vm688 = vcmp.ne.s32.totalorder %v631, 7
        %vm689 = vcmp.ne.s32.totalorder %v632, 7
        %vm690 = vcmp.ne.s32.totalorder %v633, 7
        %vm691 = vcmp.ne.s32.totalorder %v634, 7
        %vm692 = vcmp.ne.s32.totalorder %v635, 7
        %vm693 = vcmp.ne.s32.totalorder %v636, 7
        %vm694 = vcmp.ne.s32.totalorder %v637, 7
        %v695 = vrot.slane %v525, 1
        %v696 = vrot.slane %v526, 1
        %v697 = vrot.slane %v527, 1
        %v698 = vrot.slane %v528, 1
        %v699 = vrot.slane %v529, 1
        %v700 = vrot.slane %v530, 1
        %v701 = vrot.slane %v531, 1
        %v702 = vrot.slane %v532, 1
        %vm703 = vcmp.lt.s32.totalorder %v534, 7
        %v704 = vsel %vm703, %v701, %v702
        %v705 = vsel %vm703, %v700, %v701
        %v706 = vsel %vm703, %v699, %v700
        %v707 = vsel %vm703, %v698, %v699
        %v708 = vsel %vm703, %v697, %v698
        %v709 = vsel %vm703, %v696, %v697
        %v710 = vsel %vm703, %v695, %v696
        %v711 = vsel %vm703, %v702, %v695
        %v712 = vsel %vm687, 1, 0
        %v713 = vsel %vm688, 1, 0
        %v714 = vsel %vm689, 1, 0
        %v715 = vsel %vm690, 1, 0
        %v716 = vsel %vm691, 1, 0
        %v717 = vsel %vm692, 1, 0
        %v718 = vsel %vm693, 1, 0
        %v719 = vsel %vm694, 1, 0
        %vm720 = vcmp.eq.s32.totalorder %v712, 1
        %vm721 = vcmp.eq.s32.totalorder %v713, 1
        %vm722 = vcmp.eq.s32.totalorder %v714, 1
        %vm723 = vcmp.eq.s32.totalorder %v715, 1
        %vm724 = vcmp.eq.s32.totalorder %v716, 1
        %vm725 = vcmp.eq.s32.totalorder %v717, 1
        %vm726 = vcmp.eq.s32.totalorder %v718, 1
        %vm727 = vcmp.eq.s32.totalorder %v719, 1
        %v728 = vsel %vm720, %v710, 0.0
        %v729 = vsel %vm721, %v709, 0.0
        %v730 = vsel %vm722, %v708, 0.0
        %v731 = vsel %vm723, %v707, 0.0
        %v732 = vsel %vm724, %v706, 0.0
        %v733 = vsel %vm725, %v705, 0.0
        %v734 = vsel %vm726, %v704, 0.0
        %v735 = vsel %vm727, %v711, 0.0
        %744 = vrot.lane.b32.xlu0 %v525, 8
        %v745 = vpop.permute.xlu0 %744
        %746 = vrot.lane.b32.xlu0 %v526, 8
        %v747 = vpop.permute.xlu0 %746
        %748 = vrot.lane.b32.xlu0 %v527, 8
        %v749 = vpop.permute.xlu0 %748
        %750 = vrot.lane.b32.xlu0 %v528, 8
        %v751 = vpop.permute.xlu0 %750
        %752 = vrot.lane.b32.xlu0 %v529, 8
        %v753 = vpop.permute.xlu0 %752
        %754 = vrot.lane.b32.xlu0 %v530, 8
        %v755 = vpop.permute.xlu0 %754
        %756 = vrot.lane.b32.xlu0 %v531, 8
        %v757 = vpop.permute.xlu0 %756
        %758 = vrot.lane.b32.xlu0 %v532, 8
        %v759 = vpop.permute.xlu0 %758
        %776 = vrot.lane.b32.xlu0 %v728, 16
        %v777 = vpop.permute.xlu0 %776
        %778 = vrot.lane.b32.xlu0 %v729, 16
        %v779 = vpop.permute.xlu0 %778
        %780 = vrot.lane.b32.xlu0 %v730, 16
        %v781 = vpop.permute.xlu0 %780
        %782 = vrot.lane.b32.xlu0 %v731, 16
        %v783 = vpop.permute.xlu0 %782
        %784 = vrot.lane.b32.xlu0 %v732, 16
        %v785 = vpop.permute.xlu0 %784
        %786 = vrot.lane.b32.xlu0 %v733, 16
        %v787 = vpop.permute.xlu0 %786
        %788 = vrot.lane.b32.xlu0 %v734, 16
        %v789 = vpop.permute.xlu0 %788
        %790 = vrot.lane.b32.xlu0 %v735, 16
        %v791 = vpop.permute.xlu0 %790
        %vm800 = vcmask 64512
        %v801 = vsel %vm800, %v679, %v745
        %v802 = vsel %vm800, %v680, %v747
        %v803 = vsel %vm800, %v681, %v749
        %v804 = vsel %vm800, %v682, %v751
        %v805 = vsel %vm800, %v683, %v753
        %v806 = vsel %vm800, %v684, %v755
        %v807 = vsel %vm800, %v685, %v757
        %v808 = vsel %vm800, %v686, %v759
        %vm809 = vcmask 130048
        %v810 = vsel %vm809, %v801, %v777
        %v811 = vsel %vm809, %v802, %v779
        %v812 = vsel %vm809, %v803, %v781
        %v813 = vsel %vm809, %v804, %v783
        %v814 = vsel %vm809, %v805, %v785
        %v815 = vsel %vm809, %v806, %v787
        %v816 = vsel %vm809, %v807, %v789
        %v817 = vsel %vm809, %v808, %v791
        %vm818 = vcmask 195584
        %819 = vst.msk [vmem:[#allocation2] sm:$0xff] %vm818, 0.0
        %820 = vst.msk [vmem:[#allocation2 + $0x48] sm:$0xff] %vm818, 0.0
        %821 = vst.msk [vmem:[#allocation2 + $0x8] sm:$0xff] %vm818, %v810
        %822 = vst.msk [vmem:[#allocation2 + $0x10] sm:$0xff] %vm818, %v811
        %823 = vst.msk [vmem:[#allocation2 + $0x18] sm:$0xff] %vm818, %v812
        %824 = vst.msk [vmem:[#allocation2 + $0x20] sm:$0xff] %vm818, %v813
        %825 = vst.msk [vmem:[#allocation2 + $0x28] sm:$0xff] %vm818, %v814
        %826 = vst.msk [vmem:[#allocation2 + $0x30] sm:$0xff] %vm818, %v815
        %827 = vst.msk [vmem:[#allocation2 + $0x38] sm:$0xff] %vm818, %v816
        %828 = vst.msk [vmem:[#allocation2 + $0x40] sm:$0xff] %vm818, %v817
        %v829 = vld [vmem:[#allocation2] sm:$0xff]
        %v830 = vld [vmem:[#allocation2 + $0x8] sm:$0xff]
        %v831 = vld [vmem:[#allocation2 + $0x10] sm:$0xff]
        %v832 = vld [vmem:[#allocation2 + $0x18] sm:$0xff]
        %v833 = vld [vmem:[#allocation2 + $0x20] sm:$0xff]
        %v834 = vld [vmem:[#allocation2 + $0x28] sm:$0xff]
        %v835 = vld [vmem:[#allocation2 + $0x30] sm:$0xff]
        %v836 = vld [vmem:[#allocation2 + $0x38] sm:$0xff]
        %v837 = vld [vmem:[#allocation9] sm:$0xff]
        %v838 = vld [vmem:[#allocation9 + $0x8] sm:$0xff]
        %v839 = vld [vmem:[#allocation9 + $0x10] sm:$0xff]
        %v840 = vld [vmem:[#allocation2 + $0x40] sm:$0xff]
        %s841 = scalar_lea.vmem [#allocation9], 24
        %v842 = vld [vmem:[%s841] sm:$0xff]
        %v843 = vld [vmem:[%s841 + $0x8] sm:$0xff]
        %v844 = vld [vmem:[%s841 + $0x10] sm:$0xff]
        %v846 = vsel %vm818, %v830, 0
        %v849 = vsel %vm818, %v831, 0
        %v852 = vsel %vm818, %v832, 0
        %v855 = vsel %vm818, %v833, 0
        %v858 = vsel %vm818, %v834, 0
        %v861 = vsel %vm818, %v835, 0
        %v864 = vsel %vm818, %v836, 0
        %v867 = vsel %vm818, %v840, 0
        %869 = vmatprep.subr.mxu0 0.0
        %870 = vmatpush1.msra.mxu0 %v842
        %871 = vmatprep.subr.mxu0 0.0
        %872 = vmatpush1.msra.mxu0 %v843
        %873 = vmatprep.subr.mxu0 0.0
        %874 = vmatpush1.msra.mxu0 %v844
        %875 = vmatprep.subr.mxu0 0.0
        %876 = vmatpush1.msra.mxu0 0.0
        %877 = vmatprep.subr.mxu0 0.0
        %878 = vmatpush1.msra.mxu0 0.0
        %879 = vmatprep.subr.mxu0 0.0
        %880 = vmatpush1.msra.mxu0 0.0
        %881 = vmatprep.subr.mxu0 0.0
        %882 = vmatpush1.msra.mxu0 0.0
        %883 = vmatprep.subr.mxu0 0.0
        %884 = vmatpush1.msra.mxu0 0.0
        %885 = vmatprep.subr.mxu0 0.0
        %886 = vmatpush1.msra.mxu0 0.0
        %887 = vmatprep.subr.mxu0 0.0
        %888 = vmatpush1.msra.mxu0 0.0
        %889 = vmatprep.subr.mxu0 0.0
        %890 = vmatpush1.msra.mxu0 0.0
        %891 = vmatprep.subr.mxu0 0.0
        %892 = vmatpush1.msra.mxu0 0.0
        %893 = vmatprep.subr.mxu0 0.0
        %894 = vmatpush1.msra.mxu0 0.0
        %895 = vmatprep.subr.mxu0 0.0
        %896 = vmatpush1.msra.mxu0 0.0
        %897 = vmatprep.subr.mxu0 0.0
        %898 = vmatpush1.msra.mxu0 0.0
        %899 = vmatprep.subr.mxu0 0.0
        %900 = vmatpush1.msra.mxu0 0.0
        %901 = vmatprep.subr.mxu0 0.0
        %902 = vmatpush1.msra.mxu0 0.0
        %903 = vmatprep.subr.mxu0 0.0
        %904 = vmatpush1.msra.mxu0 0.0
        %905 = vmatprep.subr.mxu0 0.0
        %906 = vmatpush1.msra.mxu0 0.0
        %907 = vmatprep.subr.mxu0 0.0
        %908 = vmatpush1.msra.mxu0 0.0
        %909 = vmatprep.subr.mxu0 0.0
        %910 = vmatpush1.msra.mxu0 0.0
        %911 = vmatprep.subr.mxu0 0.0
        %912 = vmatpush1.msra.mxu0 0.0
        %913 = vmatprep.subr.mxu0 0.0
        %914 = vmatpush1.msra.mxu0 0.0
        %915 = vmatprep.subr.mxu0 0.0
        %916 = vmatpush1.msra.mxu0 0.0
        %917 = vmatprep.subr.mxu0 0.0
        %918 = vmatpush1.msra.mxu0 0.0
        %919 = vmatprep.subr.mxu0 0.0
        %920 = vmatpush1.msra.mxu0 0.0
        %921 = vmatprep.subr.mxu0 0.0
        %922 = vmatpush1.msra.mxu0 0.0
        %923 = vmatprep.subr.mxu0 0.0
        %924 = vmatpush1.msra.mxu0 0.0
        %925 = vmatprep.subr.mxu0 0.0
        %926 = vmatpush1.msra.mxu0 0.0
        %927 = vmatprep.subr.mxu0 0.0
        %928 = vmatpush1.msra.mxu0 0.0
        %929 = vmatprep.subr.mxu0 0.0
        %930 = vmatpush1.msra.mxu0 0.0
        %931 = vmatprep.subr.mxu0 0.0
        %932 = vmatpush1.msra.mxu0 0.0
        %933 = vmatprep.mubr.f32.mxu0 0.0
        %934 = vmatmul.mubr.f32.gmra.mrb[0].mxu0 %v846
        %v935 = vpop.f32.mrb[0].mxu0
        %v936 = vadd.f32 0.0, %v935
        %v937 = vpop.f32.mrb[0].mxu0
        %938 = vmatprep.mubr.f32.mxu0 0.0
        %939 = vmatmul.mubr.f32.gmra.mrb[0].mxu0 %v849
        %v940 = vpop.f32.mrb[0].mxu0
        %v941 = vadd.f32 0.0, %v940
        %v942 = vpop.f32.mrb[0].mxu0
        %943 = vmatprep.mubr.f32.mxu0 0.0
        %944 = vmatmul.mubr.f32.gmra.mrb[0].mxu0 %v852
        %v945 = vpop.f32.mrb[0].mxu0
        %v946 = vadd.f32 0.0, %v945
        %v947 = vpop.f32.mrb[0].mxu0
        %948 = vmatprep.mubr.f32.mxu0 0.0
        %949 = vmatmul.mubr.f32.gmra.mrb[0].mxu0 %v855
        %v950 = vpop.f32.mrb[0].mxu0
        %v951 = vadd.f32 0.0, %v950
        %v952 = vpop.f32.mrb[0].mxu0
        %953 = vmatprep.mubr.f32.mxu0 0.0
        %954 = vmatmul.mubr.f32.gmra.mrb[0].mxu0 %v858
        %v955 = vpop.f32.mrb[0].mxu0
        %v956 = vadd.f32 0.0, %v955
        %v957 = vpop.f32.mrb[0].mxu0
        %958 = vmatprep.mubr.f32.mxu0 0.0
        %959 = vmatmul.mubr.f32.gmra.mrb[0].mxu0 %v861
        %v960 = vpop.f32.mrb[0].mxu0
        %v961 = vadd.f32 0.0, %v960
        %v962 = vpop.f32.mrb[0].mxu0
        %963 = vmatprep.mubr.f32.mxu0 0.0
        %964 = vmatmul.mubr.f32.gmra.mrb[0].mxu0 %v864
        %v965 = vpop.f32.mrb[0].mxu0
        %v966 = vadd.f32 0.0, %v965
        %v967 = vpop.f32.mrb[0].mxu0
        %968 = vmatprep.mubr.f32.mxu0 0.0
        %969 = vmatmul.mubr.f32.gmra.mrb[0].mxu0 %v867
        %v970 = vpop.f32.mrb[0].mxu0
        %v971 = vadd.f32 0.0, %v970
        %v972 = vpop.f32.mrb[0].mxu0
        %973 = vdwg.mxu0
        %v975 = vsel %vm818, %v829, 0
        %977 = vmatprep.subr.mxu0 0.0
        %978 = vmatpush1.msra.mxu0 %v837
        %979 = vmatprep.subr.mxu0 0.0
        %980 = vmatpush1.msra.mxu0 %v838
        %981 = vmatprep.subr.mxu0 0.0
        %982 = vmatpush1.msra.mxu0 %v839
        %983 = vmatprep.subr.mxu0 0.0
        %984 = vmatpush1.msra.mxu0 0.0
        %985 = vmatprep.subr.mxu0 0.0
        %986 = vmatpush1.msra.mxu0 0.0
        %987 = vmatprep.subr.mxu0 0.0
        %988 = vmatpush1.msra.mxu0 0.0
        %989 = vmatprep.subr.mxu0 0.0
        %990 = vmatpush1.msra.mxu0 0.0
        %991 = vmatprep.subr.mxu0 0.0
        %992 = vmatpush1.msra.mxu0 0.0
        %993 = vmatprep.subr.mxu0 0.0
        %994 = vmatpush1.msra.mxu0 0.0
        %995 = vmatprep.subr.mxu0 0.0
        %996 = vmatpush1.msra.mxu0 0.0
        %997 = vmatprep.subr.mxu0 0.0
        %998 = vmatpush1.msra.mxu0 0.0
        %999 = vmatprep.subr.mxu0 0.0
        %1000 = vmatpush1.msra.mxu0 0.0
        %1001 = vmatprep.subr.mxu0 0.0
        %1002 = vmatpush1.msra.mxu0 0.0
        %1003 = vmatprep.subr.mxu0 0.0
        %1004 = vmatpush1.msra.mxu0 0.0
        %1005 = vmatprep.subr.mxu0 0.0
        %1006 = vmatpush1.msra.mxu0 0.0
        %1007 = vmatprep.subr.mxu0 0.0
        %1008 = vmatpush1.msra.mxu0 0.0
        %1009 = vmatprep.subr.mxu0 0.0
        %1010 = vmatpush1.msra.mxu0 0.0
        %1011 = vmatprep.subr.mxu0 0.0
        %1012 = vmatpush1.msra.mxu0 0.0
        %1013 = vmatprep.subr.mxu0 0.0
        %1014 = vmatpush1.msra.mxu0 0.0
        %1015 = vmatprep.subr.mxu0 0.0
        %1016 = vmatpush1.msra.mxu0 0.0
        %1017 = vmatprep.subr.mxu0 0.0
        %1018 = vmatpush1.msra.mxu0 0.0
        %1019 = vmatprep.subr.mxu0 0.0
        %1020 = vmatpush1.msra.mxu0 0.0
        %1021 = vmatprep.subr.mxu0 0.0
        %1022 = vmatpush1.msra.mxu0 0.0
        %1023 = vmatprep.subr.mxu0 0.0
        %1024 = vmatpush1.msra.mxu0 0.0
        %1025 = vmatprep.subr.mxu0 0.0
        %1026 = vmatpush1.msra.mxu0 0.0
        %1027 = vmatprep.subr.mxu0 0.0
        %1028 = vmatpush1.msra.mxu0 0.0
        %1029 = vmatprep.subr.mxu0 0.0
        %1030 = vmatpush1.msra.mxu0 0.0
        %1031 = vmatprep.subr.mxu0 0.0
        %1032 = vmatpush1.msra.mxu0 0.0
        %1033 = vmatprep.subr.mxu0 0.0
        %1034 = vmatpush1.msra.mxu0 0.0
        %1035 = vmatprep.subr.mxu0 0.0
        %1036 = vmatpush1.msra.mxu0 0.0
        %1037 = vmatprep.subr.mxu0 0.0
        %1038 = vmatpush1.msra.mxu0 0.0
        %1039 = vmatprep.subr.mxu0 0.0
        %1040 = vmatpush1.msra.mxu0 0.0
        %1041 = vmatprep.mubr.f32.mxu0 0.0
        %1042 = vmatmul.mubr.f32.gmra.mrb[0].mxu0 %v975
        %v1043 = vpop.f32.mrb[0].mxu0
        %v1044 = vadd.f32 %v936, %v1043
        %v1045 = vpop.f32.mrb[0].mxu0
        %1046 = vmatprep.mubr.f32.mxu0 0.0
        %1047 = vmatmul.mubr.f32.gmra.mrb[0].mxu0 %v846
        %v1048 = vpop.f32.mrb[0].mxu0
        %v1049 = vadd.f32 %v941, %v1048
        %v1050 = vpop.f32.mrb[0].mxu0
        %1051 = vmatprep.mubr.f32.mxu0 0.0
        %1052 = vmatmul.mubr.f32.gmra.mrb[0].mxu0 %v849
        %v1053 = vpop.f32.mrb[0].mxu0
        %v1054 = vadd.f32 %v946, %v1053
        %v1055 = vpop.f32.mrb[0].mxu0
        %1056 = vmatprep.mubr.f32.mxu0 0.0
        %1057 = vmatmul.mubr.f32.gmra.mrb[0].mxu0 %v852
        %v1058 = vpop.f32.mrb[0].mxu0
        %v1059 = vadd.f32 %v951, %v1058
        %v1060 = vpop.f32.mrb[0].mxu0
        %1061 = vmatprep.mubr.f32.mxu0 0.0
        %1062 = vmatmul.mubr.f32.gmra.mrb[0].mxu0 %v855
        %v1063 = vpop.f32.mrb[0].mxu0
        %v1064 = vadd.f32 %v956, %v1063
        %v1065 = vpop.f32.mrb[0].mxu0
        %1066 = vmatprep.mubr.f32.mxu0 0.0
        %1067 = vmatmul.mubr.f32.gmra.mrb[0].mxu0 %v858
        %v1068 = vpop.f32.mrb[0].mxu0
        %v1069 = vadd.f32 %v961, %v1068
        %v1070 = vpop.f32.mrb[0].mxu0
        %1071 = vmatprep.mubr.f32.mxu0 0.0
        %1072 = vmatmul.mubr.f32.gmra.mrb[0].mxu0 %v861
        %v1073 = vpop.f32.mrb[0].mxu0
        %v1074 = vadd.f32 %v966, %v1073
        %v1075 = vpop.f32.mrb[0].mxu0
        %1076 = vmatprep.mubr.f32.mxu0 0.0
        %1077 = vmatmul.mubr.f32.gmra.mrb[0].mxu0 %v864
        %v1078 = vpop.f32.mrb[0].mxu0
        %v1079 = vadd.f32 %v971, %v1078
        %v1080 = vpop.f32.mrb[0].mxu0
        %1081 = vdwg.mxu0
        %v1082 = vld [vmem:[#allocation2 + $0x10] sm:$0xff]
        %v1083 = vld [vmem:[#allocation2 + $0x18] sm:$0xff]
        %v1084 = vld [vmem:[#allocation2 + $0x20] sm:$0xff]
        %v1085 = vld [vmem:[#allocation2 + $0x28] sm:$0xff]
        %v1086 = vld [vmem:[#allocation2 + $0x30] sm:$0xff]
        %v1087 = vld [vmem:[#allocation2 + $0x38] sm:$0xff]
        %v1088 = vld [vmem:[#allocation2 + $0x40] sm:$0xff]
        %v1089 = vld [vmem:[#allocation2 + $0x48] sm:$0xff]
        %s1090 = scalar_lea.vmem [#allocation9], 48
        %v1091 = vld [vmem:[%s1090] sm:$0xff]
        %v1092 = vld [vmem:[%s1090 + $0x8] sm:$0xff]
        %v1093 = vld [vmem:[%s1090 + $0x10] sm:$0xff]
        %v1095 = vsel %vm818, %v1082, 0
        %v1098 = vsel %vm818, %v1083, 0
        %v1101 = vsel %vm818, %v1084, 0
        %v1104 = vsel %vm818, %v1085, 0
        %v1107 = vsel %vm818, %v1086, 0
        %v1110 = vsel %vm818, %v1087, 0
        %v1113 = vsel %vm818, %v1088, 0
        %v1116 = vsel %vm818, %v1089, 0
        %1118 = vmatprep.subr.mxu0 0.0
        %1119 = vmatpush1.msra.mxu0 %v1091
        %1120 = vmatprep.subr.mxu0 0.0
        %1121 = vmatpush1.msra.mxu0 %v1092
        %1122 = vmatprep.subr.mxu0 0.0
        %1123 = vmatpush1.msra.mxu0 %v1093
        %1124 = vmatprep.subr.mxu0 0.0
        %1125 = vmatpush1.msra.mxu0 0.0
        %1126 = vmatprep.subr.mxu0 0.0
        %1127 = vmatpush1.msra.mxu0 0.0
        %1128 = vmatprep.subr.mxu0 0.0
        %1129 = vmatpush1.msra.mxu0 0.0
        %1130 = vmatprep.subr.mxu0 0.0
        %1131 = vmatpush1.msra.mxu0 0.0
        %1132 = vmatprep.subr.mxu0 0.0
        %1133 = vmatpush1.msra.mxu0 0.0
        %1134 = vmatprep.subr.mxu0 0.0
        %1135 = vmatpush1.msra.mxu0 0.0
        %1136 = vmatprep.subr.mxu0 0.0
        %1137 = vmatpush1.msra.mxu0 0.0
        %1138 = vmatprep.subr.mxu0 0.0
        %1139 = vmatpush1.msra.mxu0 0.0
        %1140 = vmatprep.subr.mxu0 0.0
        %1141 = vmatpush1.msra.mxu0 0.0
        %1142 = vmatprep.subr.mxu0 0.0
        %1143 = vmatpush1.msra.mxu0 0.0
        %1144 = vmatprep.subr.mxu0 0.0
        %1145 = vmatpush1.msra.mxu0 0.0
        %1146 = vmatprep.subr.mxu0 0.0
        %1147 = vmatpush1.msra.mxu0 0.0
        %1148 = vmatprep.subr.mxu0 0.0
        %1149 = vmatpush1.msra.mxu0 0.0
        %1150 = vmatprep.subr.mxu0 0.0
        %1151 = vmatpush1.msra.mxu0 0.0
        %1152 = vmatprep.subr.mxu0 0.0
        %1153 = vmatpush1.msra.mxu0 0.0
        %1154 = vmatprep.subr.mxu0 0.0
        %1155 = vmatpush1.msra.mxu0 0.0
        %1156 = vmatprep.subr.mxu0 0.0
        %1157 = vmatpush1.msra.mxu0 0.0
        %1158 = vmatprep.subr.mxu0 0.0
        %1159 = vmatpush1.msra.mxu0 0.0
        %1160 = vmatprep.subr.mxu0 0.0
        %1161 = vmatpush1.msra.mxu0 0.0
        %1162 = vmatprep.subr.mxu0 0.0
        %1163 = vmatpush1.msra.mxu0 0.0
        %1164 = vmatprep.subr.mxu0 0.0
        %1165 = vmatpush1.msra.mxu0 0.0
        %1166 = vmatprep.subr.mxu0 0.0
        %1167 = vmatpush1.msra.mxu0 0.0
        %1168 = vmatprep.subr.mxu0 0.0
        %1169 = vmatpush1.msra.mxu0 0.0
        %1170 = vmatprep.subr.mxu0 0.0
        %1171 = vmatpush1.msra.mxu0 0.0
        %1172 = vmatprep.subr.mxu0 0.0
        %1173 = vmatpush1.msra.mxu0 0.0
        %1174 = vmatprep.subr.mxu0 0.0
        %1175 = vmatpush1.msra.mxu0 0.0
        %1176 = vmatprep.subr.mxu0 0.0
        %1177 = vmatpush1.msra.mxu0 0.0
        %1178 = vmatprep.subr.mxu0 0.0
        %1179 = vmatpush1.msra.mxu0 0.0
        %1180 = vmatprep.subr.mxu0 0.0
        %1181 = vmatpush1.msra.mxu0 0.0
        %1182 = vmatprep.mubr.f32.mxu0 0.0
        %1183 = vmatmul.mubr.f32.gmra.mrb[0].mxu0 %v1095
        %v1184 = vpop.f32.mrb[0].mxu0
        %v1185 = vadd.f32 0.0, %v1184
        %v1186 = vpop.f32.mrb[0].mxu0
        %1187 = vmatprep.mubr.f32.mxu0 0.0
        %1188 = vmatmul.mubr.f32.gmra.mrb[0].mxu0 %v1098
        %v1189 = vpop.f32.mrb[0].mxu0
        %v1190 = vadd.f32 0.0, %v1189
        %v1191 = vpop.f32.mrb[0].mxu0
        %1192 = vmatprep.mubr.f32.mxu0 0.0
        %1193 = vmatmul.mubr.f32.gmra.mrb[0].mxu0 %v1101
        %v1194 = vpop.f32.mrb[0].mxu0
        %v1195 = vadd.f32 0.0, %v1194
        %v1196 = vpop.f32.mrb[0].mxu0
        %1197 = vmatprep.mubr.f32.mxu0 0.0
        %1198 = vmatmul.mubr.f32.gmra.mrb[0].mxu0 %v1104
        %v1199 = vpop.f32.mrb[0].mxu0
        %v1200 = vadd.f32 0.0, %v1199
        %v1201 = vpop.f32.mrb[0].mxu0
        %1202 = vmatprep.mubr.f32.mxu0 0.0
        %1203 = vmatmul.mubr.f32.gmra.mrb[0].mxu0 %v1107
        %v1204 = vpop.f32.mrb[0].mxu0
        %v1205 = vadd.f32 0.0, %v1204
        %v1206 = vpop.f32.mrb[0].mxu0
        %1207 = vmatprep.mubr.f32.mxu0 0.0
        %1208 = vmatmul.mubr.f32.gmra.mrb[0].mxu0 %v1110
        %v1209 = vpop.f32.mrb[0].mxu0
        %v1210 = vadd.f32 0.0, %v1209
        %v1211 = vpop.f32.mrb[0].mxu0
        %1212 = vmatprep.mubr.f32.mxu0 0.0
        %1213 = vmatmul.mubr.f32.gmra.mrb[0].mxu0 %v1113
        %v1214 = vpop.f32.mrb[0].mxu0
        %v1215 = vadd.f32 0.0, %v1214
        %v1216 = vpop.f32.mrb[0].mxu0
        %1217 = vmatprep.mubr.f32.mxu0 0.0
        %1218 = vmatmul.mubr.f32.gmra.mrb[0].mxu0 %v1116
        %v1219 = vpop.f32.mrb[0].mxu0
        %v1220 = vadd.f32 0.0, %v1219
        %v1221 = vpop.f32.mrb[0].mxu0
        %1222 = vdwg.mxu0
        %v1223 = vadd.f32 %v1044, %v1185
        %v1224 = vadd.f32 %v1049, %v1190
        %v1225 = vadd.f32 %v1054, %v1195
        %v1226 = vadd.f32 %v1059, %v1200
        %v1227 = vadd.f32 %v1064, %v1205
        %v1228 = vadd.f32 %v1069, %v1210
        %v1229 = vadd.f32 %v1074, %v1215
        %v1230 = vadd.f32 %v1079, %v1220
        %v1231 = vld [vmem:[#allocation11] sm:$0x1]
        %v1233 = vlaneseq
        %v1234 = vshrl.u32 %v1233, 7
        %v1235 = vsub.s32 0, %v1234
        %v1236 = vrot.slane %v1231, %v1235
        %v1238 = vadd.f32 %v1223, %v1236
        %v1239 = vadd.f32 %v1224, %v1236
        %v1240 = vadd.f32 %v1225, %v1236
        %v1241 = vadd.f32 %v1226, %v1236
        %v1242 = vadd.f32 %v1227, %v1236
        %v1243 = vadd.f32 %v1228, %v1236
        %v1244 = vadd.f32 %v1229, %v1236
        %v1245 = vadd.f32 %v1230, %v1236
        %v1246 = vmax.f32 %v1238, 0.0
        %v1247 = vmax.f32 %v1239, 0.0
        %v1248 = vmax.f32 %v1240, 0.0
        %v1249 = vmax.f32 %v1241, 0.0
        %v1250 = vmax.f32 %v1242, 0.0
        %v1251 = vmax.f32 %v1243, 0.0
        %v1252 = vmax.f32 %v1244, 0.0
        %v1253 = vmax.f32 %v1245, 0.0
        %v1254 = vld [vmem:[#allocation12] sm:$0xff]
        %v1255 = vld [vmem:[#allocation14] sm:$0x1]
        %v1257 = vlaneseq
        %v1258 = vshrl.u32 %v1257, 7
        %v1259 = vsub.s32 0, %v1258
        %v1260 = vrot.slane %v1255, %v1259
        %v1263 = vsel %vm800, %v1246, 0
        %v1266 = vsel %vm800, %v1247, 0
        %v1269 = vsel %vm800, %v1248, 0
        %v1272 = vsel %vm800, %v1249, 0
        %v1275 = vsel %vm800, %v1250, 0
        %v1278 = vsel %vm800, %v1251, 0
        %v1281 = vsel %vm800, %v1252, 0
        %v1284 = vsel %vm800, %v1253, 0
        %1286 = vmatprep.subr.mxu0 0.0
        %1287 = vmatpush1.msra.mxu0 %v1254
        %1288 = vmatprep.subr.mxu0 0.0
        %1289 = vmatpush1.msra.mxu0 0.0
        %1290 = vmatprep.subr.mxu0 0.0
        %1291 = vmatpush1.msra.mxu0 0.0
        %1292 = vmatprep.subr.mxu0 0.0
        %1293 = vmatpush1.msra.mxu0 0.0
        %1294 = vmatprep.subr.mxu0 0.0
        %1295 = vmatpush1.msra.mxu0 0.0
        %1296 = vmatprep.subr.mxu0 0.0
        %1297 = vmatpush1.msra.mxu0 0.0
        %1298 = vmatprep.subr.mxu0 0.0
        %1299 = vmatpush1.msra.mxu0 0.0
        %1300 = vmatprep.subr.mxu0 0.0
        %1301 = vmatpush1.msra.mxu0 0.0
        %1302 = vmatprep.subr.mxu0 0.0
        %1303 = vmatpush1.msra.mxu0 0.0
        %1304 = vmatprep.subr.mxu0 0.0
        %1305 = vmatpush1.msra.mxu0 0.0
        %1306 = vmatprep.subr.mxu0 0.0
        %1307 = vmatpush1.msra.mxu0 0.0
        %1308 = vmatprep.subr.mxu0 0.0
        %1309 = vmatpush1.msra.mxu0 0.0
        %1310 = vmatprep.subr.mxu0 0.0
        %1311 = vmatpush1.msra.mxu0 0.0
        %1312 = vmatprep.subr.mxu0 0.0
        %1313 = vmatpush1.msra.mxu0 0.0
        %1314 = vmatprep.subr.mxu0 0.0
        %1315 = vmatpush1.msra.mxu0 0.0
        %1316 = vmatprep.subr.mxu0 0.0
        %1317 = vmatpush1.msra.mxu0 0.0
        %1318 = vmatprep.subr.mxu0 0.0
        %1319 = vmatpush1.msra.mxu0 0.0
        %1320 = vmatprep.subr.mxu0 0.0
        %1321 = vmatpush1.msra.mxu0 0.0
        %1322 = vmatprep.subr.mxu0 0.0
        %1323 = vmatpush1.msra.mxu0 0.0
        %1324 = vmatprep.subr.mxu0 0.0
        %1325 = vmatpush1.msra.mxu0 0.0
        %1326 = vmatprep.subr.mxu0 0.0
        %1327 = vmatpush1.msra.mxu0 0.0
        %1328 = vmatprep.subr.mxu0 0.0
        %1329 = vmatpush1.msra.mxu0 0.0
        %1330 = vmatprep.subr.mxu0 0.0
        %1331 = vmatpush1.msra.mxu0 0.0
        %1332 = vmatprep.subr.mxu0 0.0
        %1333 = vmatpush1.msra.mxu0 0.0
        %1334 = vmatprep.subr.mxu0 0.0
        %1335 = vmatpush1.msra.mxu0 0.0
        %1336 = vmatprep.subr.mxu0 0.0
        %1337 = vmatpush1.msra.mxu0 0.0
        %1338 = vmatprep.subr.mxu0 0.0
        %1339 = vmatpush1.msra.mxu0 0.0
        %1340 = vmatprep.subr.mxu0 0.0
        %1341 = vmatpush1.msra.mxu0 0.0
        %1342 = vmatprep.subr.mxu0 0.0
        %1343 = vmatpush1.msra.mxu0 0.0
        %1344 = vmatprep.subr.mxu0 0.0
        %1345 = vmatpush1.msra.mxu0 0.0
        %1346 = vmatprep.subr.mxu0 0.0
        %1347 = vmatpush1.msra.mxu0 0.0
        %1348 = vmatprep.subr.mxu0 0.0
        %1349 = vmatpush1.msra.mxu0 0.0
        %1350 = vmatprep.mubr.f32.mxu0 0.0
        %1351 = vmatmul.mubr.f32.gmra.mrb[0].mxu0 %v1263
        %v1352 = vpop.f32.mrb[0].mxu0
        %v1353 = vadd.f32 %v1260, %v1352
        %v1354 = vpop.f32.mrb[0].mxu0
        %1355 = vmatprep.mubr.f32.mxu0 0.0
        %1356 = vmatmul.mubr.f32.gmra.mrb[0].mxu0 %v1266
        %v1357 = vpop.f32.mrb[0].mxu0
        %v1358 = vadd.f32 %v1260, %v1357
        %v1359 = vpop.f32.mrb[0].mxu0
        %1360 = vmatprep.mubr.f32.mxu0 0.0
        %1361 = vmatmul.mubr.f32.gmra.mrb[0].mxu0 %v1269
        %v1362 = vpop.f32.mrb[0].mxu0
        %v1363 = vadd.f32 %v1260, %v1362
        %v1364 = vpop.f32.mrb[0].mxu0
        %1365 = vmatprep.mubr.f32.mxu0 0.0
        %1366 = vmatmul.mubr.f32.gmra.mrb[0].mxu0 %v1272
        %v1367 = vpop.f32.mrb[0].mxu0
        %v1368 = vadd.f32 %v1260, %v1367
        %v1369 = vpop.f32.mrb[0].mxu0
        %1370 = vmatprep.mubr.f32.mxu0 0.0
        %1371 = vmatmul.mubr.f32.gmra.mrb[0].mxu0 %v1275
        %v1372 = vpop.f32.mrb[0].mxu0
        %v1373 = vadd.f32 %v1260, %v1372
        %v1374 = vpop.f32.mrb[0].mxu0
        %1375 = vmatprep.mubr.f32.mxu0 0.0
        %1376 = vmatmul.mubr.f32.gmra.mrb[0].mxu0 %v1278
        %v1377 = vpop.f32.mrb[0].mxu0
        %v1378 = vadd.f32 %v1260, %v1377
        %v1379 = vpop.f32.mrb[0].mxu0
        %1380 = vmatprep.mubr.f32.mxu0 0.0
        %1381 = vmatmul.mubr.f32.gmra.mrb[0].mxu0 %v1281
        %v1382 = vpop.f32.mrb[0].mxu0
        %v1383 = vadd.f32 %v1260, %v1382
        %v1384 = vpop.f32.mrb[0].mxu0
        %1385 = vmatprep.mubr.f32.mxu0 0.0
        %1386 = vmatmul.mubr.f32.gmra.mrb[0].mxu0 %v1284
        %v1387 = vpop.f32.mrb[0].mxu0
        %v1388 = vadd.f32 %v1260, %v1387
        %v1389 = vpop.f32.mrb[0].mxu0
        %1390 = vdwg.mxu0
        %v1391 = vadd.f32 %v1353, %v376
        %v1392 = vadd.f32 %v1358, %v377
        %v1393 = vadd.f32 %v1363, %v378
        %v1394 = vadd.f32 %v1368, %v379
        %v1395 = vadd.f32 %v1373, %v380
        %v1396 = vadd.f32 %v1378, %v381
        %v1397 = vadd.f32 %v1383, %v382
        %v1398 = vadd.f32 %v1388, %v383
        %v1399 = vmax.f32 %v1391, 0.0
        %v1400 = vmax.f32 %v1392, 0.0
        %v1401 = vmax.f32 %v1393, 0.0
        %v1402 = vmax.f32 %v1394, 0.0
        %v1403 = vmax.f32 %v1395, 0.0
        %v1404 = vmax.f32 %v1396, 0.0
        %v1405 = vmax.f32 %v1397, 0.0
        %v1406 = vmax.f32 %v1398, 0.0
        %1407 = vst.msk [vmem:[%s375] sm:$0xff] %vm395, %v1399
        %1408 = vst.msk [vmem:[%s375 + $0x8] sm:$0xff] %vm395, %v1400
        %1409 = vst.msk [vmem:[%s375 + $0x10] sm:$0xff] %vm395, %v1401
        %1410 = vst.msk [vmem:[%s375 + $0x18] sm:$0xff] %vm395, %v1402
        %1411 = vst.msk [vmem:[%s375 + $0x20] sm:$0xff] %vm395, %v1403
        %1412 = vst.msk [vmem:[%s375 + $0x28] sm:$0xff] %vm395, %v1404
        %1413 = vst.msk [vmem:[%s375 + $0x30] sm:$0xff] %vm395, %v1405
        %1414 = vst.msk [vmem:[%s375 + $0x38] sm:$0xff] %vm395, %v1406
        %s1415 = sand.u32 %s187, 1
        %s1416 = scalar_lea.sflag [#allocation5], %s1415
        %s1417 = sand.u32 %s187, 1
        %s1418 = smul.addr %s1417, 64
        %s1419 = scalar_lea.vmem [#allocation15], %s1418
        // Predicated region
        $region77: #{tpu_custom_call.1} parent=47 // pred_check
          %p1420 = pneg %p197
        $region78: #{tpu_custom_call.1} parent=47 // pred_check_branch
          %1422 = sbr.rel (%p1420) target = $region80
        $region79: #{tpu_custom_call.1} parent=47 // pred_region
          %s1424 = ssub.s32 1024, 1024
          %1425 = vsyncadd %s1416, %s1424
          %s1426 = smul.addr %s27, 8
          %s1427 = smul.addr %s1426, 128
          %s1428 = scalar_lea.hbm %s7, %s1427
          %s1429 = sshll.u32 %s1419, 4
          %s1430 = int_to_ptr.vmem [resolvable:$true] %s1429
          %1435 = dma.vmem_to_hbm [thread:$0]  %s1430, 1024, %s1428, %s1416, 128, 128, 8
        $region80: #{tpu_custom_call.1} parent=47 // pred_fallthru
          _
      $region48: #{tpu_custom_call.1} parent=5 // pred_fallthru
        _
      %p1436 = scmp.le.s32.totalorder 2, %s22
      // Predicated region
      $region81: #{tpu_custom_call.1} parent=5 // pred_check
        %p1437 = pneg %p1436
      $region82: #{tpu_custom_call.1} parent=5 // pred_check_branch
        %1439 = sbr.rel (%p1437) target = $region84
      $region83: #{tpu_custom_call.1} parent=5 // pred_region
        %s1440 = ssub.s32 %s22, 2
        // Predicated region
        $region85: #{tpu_custom_call.1} parent=83 // pred_check
          %p1441 = pneg %p203
        $region86: #{tpu_custom_call.1} parent=83 // pred_check_branch
          %1443 = sbr.rel (%p1441) target = $region88
        $region87: #{tpu_custom_call.1} parent=83 // pred_region
          %s1444 = sand.u32 %s188, 1
          %s1445 = scalar_lea.sflag [#allocation5], %s1444
          %s1446 = sand.u32 %s188, 1
          %s1447 = smul.addr %s1446, 64
          %s1448 = scalar_lea.vmem [#allocation15], %s1447
          %1449 = dma.done %s1445, 1024
        $region88: #{tpu_custom_call.1} parent=83 // pred_fallthru
          _
      $region84: #{tpu_custom_call.1} parent=5 // pred_fallthru
        _
    $region6: #{tpu_custom_call.1} parent=1 // loop_footer
      %s26 = sadd.s32 1, %s22
    $region7: #{tpu_custom_call.1} parent=1 // loop_footer_branch
      %21 = sbr.rel target = $region3
    $region8: #{tpu_custom_call.1} parent=1 // loop_exit
      _
    %1450 = vsyncpa [#allocation4], 1
    %s1451 = scalar_lea.sflag [#allocation4], 1
    %1452 = vsyncpa %s1451, 1
    %1453 = vsyncpa [#allocation7], 1
    %1454 = vsyncpa [#allocation10], 1
    %1455 = vsyncpa [#allocation13], 1
    %1456 = vsyncpa [#allocation5], 1
    %s1457 = scalar_lea.sflag [#allocation5], 1
    %1458 = vsyncpa %s1457, 1

</llo_original>
